<compile_context>
chip_gen: v7x
topology: tpu7x:2x2x1
jax: 0.10.0
libtpu: 0.0.40
codegen_flags: <defaults>
</compile_context>

<pallas_src>
import functools

import numpy as np

import jax
import jax.numpy as jnp
from jax import lax
from jax.experimental import pallas as pl
from jax.experimental.pallas import tpu as pltpu


def _shift_lanes(z, k):
    """out[..., p] = z[..., p + k] along the last (lane) axis, zero outside."""
    if k == 0:
        return z
    hw = z.shape[-1]
    if abs(k) >= hw:
        return jnp.zeros_like(z)
    pad = jnp.zeros(z.shape[:-1] + (abs(k),), z.dtype)
    if k > 0:
        return jnp.concatenate([z[..., k:], pad], axis=-1)
    return jnp.concatenate([pad, z[..., :hw + k]], axis=-1)


def _reconv_kernel(xm_ref, halo_ref, w_ref, o_ref, *, td, w_len):
    # xm:   (Cin,  TD, H*W)  current D-tile (channels-first, lane-dense H*W)
    # halo: (2*Cin, H*W)     rows [0:Cin] = plane d0-1, rows [Cin:] = plane d0+TD
    #                        (already zeroed at the global D edges)
    # w:    (Cout, 7*Cin)    folded taps [centre | D-1 | D+1 | H-1 | H+1 | W-1 | W+1]
    # o:    (Cout, TD, H*W)
    cin = xm_ref.shape[0]
    hw = xm_ref.shape[-1]
    w_all = w_ref[...]
    cdt = w_all.dtype

    # Lane masks over the flattened H*W axis: stop the W-direction taps from
    # leaking across a W-row boundary.
    wpos = lax.broadcasted_iota(jnp.int32, (1, hw), 1) % w_len
    m_wm = (wpos != (w_len - 1)).astype(cdt)   # kills src col W-1 -> dst col 0
    m_wp = (wpos != 0).astype(cdt)             # kills src col 0   -> dst col W-1

    x_prev = halo_ref[:cin, :].astype(cdt)     # (Cin, H*W)
    x_next = halo_ref[cin:, :].astype(cdt)     # (Cin, H*W)

    # Static (unrolled) loop over the TD spectral planes of this tile.
    for dloc in range(td):
        xd = xm_ref[:, dloc, :].astype(cdt)                              # (Cin, H*W)
        x_dm = x_prev if dloc == 0 else xm_ref[:, dloc - 1, :].astype(cdt)
        x_dp = x_next if dloc == td - 1 else xm_ref[:, dloc + 1, :].astype(cdt)

        # One fused matmul per output plane: K = 7*Cin.
        x_stack = jnp.concatenate(
            [
                xd,                              # merged centre taps of all 3 convs
                x_dm,                            # D tap @ d-1
                x_dp,                            # D tap @ d+1
                _shift_lanes(xd, -w_len),        # H tap @ h-1
                _shift_lanes(xd, +w_len),        # H tap @ h+1
                _shift_lanes(xd * m_wm, -1),     # W tap @ w-1
                _shift_lanes(xd * m_wp, +1),     # W tap @ w+1
            ],
            axis=0,
        )                                        # (7*Cin, H*W)

        row = jnp.dot(w_all, x_stack, preferred_element_type=jnp.float32)
        o_ref[:, dloc, :] = row.astype(o_ref.dtype)   # lane-dense store


def _fold_weights(w1_t, w2_t, w3_t, wa_t):
    """Fold the 1x1x1 aggregation into the directional taps (f32 on host)."""
    cout = w1_t.shape[0]
    f32 = jnp.float32
    wa = wa_t[:, :, 0, 0, 0].astype(f32)              # (Cout, 3*Cout)
    wD = w1_t[:, :, :, 0, 0].astype(f32)              # (Cout, Cin, 3): k=0 -> d-1, k=2 -> d+1
    wH = w2_t[:, :, 0, :, 0].astype(f32)
    wW = w3_t[:, :, 0, 0, :].astype(f32)
    waD, waH, waW = wa[:, :cout], wa[:, cout:2 * cout], wa[:, 2 * cout:]

    def fold(wa_dir, w_dir, k):                       # -> (Cout, Cin)
        return wa_dir @ w_dir[:, :, k]

    centre = fold(waD, wD, 1) + fold(waH, wH, 1) + fold(waW, wW, 1)
    return jnp.concatenate(
        [centre,
         fold(waD, wD, 0), fold(waD, wD, 2),
         fold(waH, wH, 0), fold(waH, wH, 2),
         fold(waW, wW, 0), fold(waW, wW, 2)],
        axis=1)                                        # (Cout, 7*Cin)


def _pick_td(d, cin, cout, hw, itemsize, vmem_budget=8 * 1024 * 1024):
    """D-tile size: multiple of 8 dividing D, under a VMEM budget, preferring
    >= 2 tiles so the second parallel grid axis has work for both cores."""
    if d % 8 != 0:
        return d                                       # fall back to the full D axis
    per_plane = (cin + cout) * hw * itemsize * 2       # double-buffered in + out per plane
    divisors = [m for m in range(8, d + 1, 8) if d % m == 0]
    fits = [m for m in divisors if m * per_plane <= vmem_budget]
    if not fits:
        return divisors[0]
    small = [m for m in fits if m <= d // 2]
    return max(small) if small else max(fits)


def _build_halo(x_r, td):
    """Pre-gathered, pre-masked D-halo planes: (n, n_t, 2*Cin, H*W)."""
    n, cin, d, hw = x_r.shape
    n_t = d // td
    starts = np.arange(n_t) * td
    prev_idx = np.maximum(starts - 1, 0)
    next_idx = np.minimum(starts + td, d - 1)
    prev = x_r[:, :, prev_idx, :]                      # (n, Cin, n_t, H*W)
    nxt = x_r[:, :, next_idx, :]
    prev_ok = jnp.asarray(starts - 1 >= 0, dtype=x_r.dtype)[None, None, :, None]
    next_ok = jnp.asarray(starts + td <= d - 1, dtype=x_r.dtype)[None, None, :, None]
    halo = jnp.concatenate([prev * prev_ok, nxt * next_ok], axis=1)   # (n, 2Cin, n_t, hw)
    return jnp.transpose(halo, (0, 2, 1, 3))           # (n, n_t, 2*Cin, hw)


def reconv_pallas(x, w1_t, w2_t, w3_t, wa_t, *, td=None):
    """x: (N, Cin, D, H, W); weights in PyTorch Conv3d layout.  Returns NCDHW."""
    n, cin, d, h, w = x.shape
    cout = w1_t.shape[0]
    hw = h * w

    w_stack = _fold_weights(w1_t, w2_t, w3_t, wa_t)    # (Cout, 7*Cin), f32
    if x.dtype == jnp.bfloat16:
        w_stack = w_stack.astype(jnp.bfloat16)         # bf16 MXU operands, f32 accumulate

    if td is None:
        td = _pick_td(d, cin, cout, hw, x.dtype.itemsize)
    assert d % td == 0, (d, td)
    n_t = d // td

    # Channels-first with flattened spatial (lane) axis: free reshape, no transposes.
    x_r = x.reshape(n, cin, d, hw)
    halo = _build_halo(x_r, td)                        # tiny (2 planes per D-tile)

    kernel = functools.partial(_reconv_kernel, td=td, w_len=w)

    out = pl.pallas_call(
        kernel,
        out_shape=jax.ShapeDtypeStruct((n, cout, d, hw), x.dtype),
        grid=(n, n_t),
        in_specs=[
            # main D-tile: (Cin, TD, H*W), last two dims tile-aligned / full
            pl.BlockSpec((None, cin, td, hw), lambda i, t: (i, 0, t, 0)),
            # pre-masked halo planes for this tile: (2*Cin, H*W)
            pl.BlockSpec((None, None, 2 * cin, hw), lambda i, t: (i, t, 0, 0)),
            # folded weights (resident)
            pl.BlockSpec((cout, 7 * cin), lambda i, t: (0, 0)),
        ],
        out_specs=pl.BlockSpec((None, cout, td, hw), lambda i, t: (i, 0, t, 0)),
        compiler_params=pltpu.CompilerParams(
            dimension_semantics=("parallel", "parallel"),
            vmem_limit_bytes=32 * 1024 * 1024,
        ),
        cost_estimate=pl.CostEstimate(
            flops=2 * n * d * hw * (7 * cin) * cout,
            transcendentals=0,
            bytes_accessed=(n * (cin + cout) * d * hw + cout * 7 * cin)
            * x.dtype.itemsize,
        ),
    )(x_r, halo, w_stack)

    return out.reshape(n, cout, d, h, w)


def reconv_reference(x, w1_t, w2_t, w3_t, wa_t):
    """Pure-JAX reference using lax.conv_general_dilated (NCDHW, OIDHW)."""
    dn = ("NCDHW", "OIDHW", "NCDHW")
    c1 = lax.conv_general_dilated(x, w1_t, (1, 1, 1),
                                  [(1, 1), (0, 0), (0, 0)], dimension_numbers=dn)
    c2 = lax.conv_general_dilated(x, w2_t, (1, 1, 1),
                                  [(0, 0), (1, 1), (0, 0)], dimension_numbers=dn)
    c3 = lax.conv_general_dilated(x, w3_t, (1, 1, 1),
                                  [(0, 0), (0, 0), (1, 1)], dimension_numbers=dn)
    cat = jnp.concatenate([c1, c2, c3], axis=1)
    return lax.conv_general_dilated(cat, wa_t, (1, 1, 1),
                                    [(0, 0), (0, 0), (0, 0)], dimension_numbers=dn)


if __name__ == "__main__":
    # D=16 -> TD=8, two D-tiles: exercises the halo path and the 2nd grid axis.
    N, Cin, Cout, D, H, W = 2, 4, 4, 16, 8, 8

    key = jax.random.PRNGKey(0)
    kx, k1, k2, k3, ka = jax.random.split(key, 5)

    x = jax.random.normal(kx, (N, Cin, D, H, W), dtype=jnp.float32)
    # PyTorch Conv3d weight layout: (out_channels, in_channels, kD, kH, kW)
    w1_t = 0.1 * jax.random.normal(k1, (Cout, Cin, 3, 1, 1), dtype=jnp.float32)
    w2_t = 0.1 * jax.random.normal(k2, (Cout, Cin, 1, 3, 1), dtype=jnp.float32)
    w3_t = 0.1 * jax.random.normal(k3, (Cout, Cin, 1, 1, 3), dtype=jnp.float32)
    wa_t = 0.1 * jax.random.normal(ka, (Cout, 3 * Cout, 1, 1, 1), dtype=jnp.float32)

    out = jax.jit(reconv_pallas)(x, w1_t, w2_t, w3_t, wa_t)
    out = jax.block_until_ready(out)

    ref = reconv_reference(x, w1_t, w2_t, w3_t, wa_t)
    assert out.shape == (N, Cout, D, H, W), out.shape
    max_err = float(jnp.max(jnp.abs(out - ref)))
    # Tolerance covers possible reduced-precision MXU passes in both paths.
    assert max_err < 5e-3, max_err

    print("KERNEL_OK")
</pallas_src>

<mosaic_0001>
module attributes {stable_mosaic.version = 11 : i64} {
  func.func @_reconv_kernel(%arg0: i32, %arg1: i32, %arg2: memref<1x4x8x64xf32, #tpu.memory_space<vmem>>, %arg3: memref<1x1x8x64xf32, #tpu.memory_space<vmem>>, %arg4: memref<4x28xf32, #tpu.memory_space<vmem>>, %arg5: memref<1x4x8x64xf32, #tpu.memory_space<vmem>>) attributes {dimension_semantics = [#tpu.dimension_semantics<parallel>, #tpu.dimension_semantics<parallel>], iteration_bounds = array<i64: 2, 2>, scalar_prefetch = 0 : i64, scratch_operands = 0 : i64, tpu.core_type = #tpu.core_type<tc>, window_params = [{transform_indices = @transform_0, window_bounds = array<i64: 1, 4, 8, 64>}, {transform_indices = @transform_1, window_bounds = array<i64: 1, 1, 8, 64>}, {pipeline_mode = #tpu.pipeline_mode<synchronous>, transform_indices = @transform_2, window_bounds = array<i64: 4, 28>}, {transform_indices = @transform_3, window_bounds = array<i64: 1, 4, 8, 64>}]} {
    %c0 = arith.constant 0 : index
    %c0_0 = arith.constant 0 : index
    %0 = vector.load %arg4[%c0, %c0_0] : memref<4x28xf32, #tpu.memory_space<vmem>>, vector<4x28xf32>
    %1 = tpu.iota {dimensions = array<i32: 1>} : vector<1x64xi32>
    %c8_i32 = arith.constant 8 : i32
    %c0_i32 = arith.constant 0 : i32
    %2 = arith.cmpi eq, %c8_i32, %c0_i32 : i32
    %c1_i32 = arith.constant 1 : i32
    %3 = arith.select %2, %c1_i32, %c8_i32 : i32
    %4 = vector.broadcast %3 : i32 to vector<1x64xi32>
    %5 = arith.remsi %1, %4 : vector<1x64xi32>
    %c0_i32_1 = arith.constant 0 : i32
    %6 = vector.broadcast %c0_i32_1 : i32 to vector<1x64xi32>
    %7 = arith.cmpi ne, %5, %6 : vector<1x64xi32>
    %c0_i32_2 = arith.constant 0 : i32
    %8 = vector.broadcast %c0_i32_2 : i32 to vector<1x64xi32>
    %9 = arith.cmpi slt, %5, %8 : vector<1x64xi32>
    %c0_i32_3 = arith.constant 0 : i32
    %10 = arith.cmpi slt, %3, %c0_i32_3 : i32
    %11 = vector.broadcast %10 : i1 to vector<1x64xi1>
    %12 = vector.broadcast %11 : vector<1x64xi1> to vector<1x64xi1>
    %13 = arith.xori %9, %12 : vector<1x64xi1>
    %14 = arith.andi %13, %7 : vector<1x64xi1>
    %15 = vector.broadcast %3 : i32 to vector<1x64xi32>
    %16 = arith.addi %5, %15 : vector<1x64xi32>
    %17 = arith.select %14, %16, %5 : vector<1x64xi1>, vector<1x64xi32>
    %c7_i32 = arith.constant 7 : i32
    %18 = vector.broadcast %c7_i32 : i32 to vector<1x64xi32>
    %19 = arith.cmpi ne, %17, %18 : vector<1x64xi32>
    %20 = arith.extui %19 : vector<1x64xi1> to vector<1x64xi32>
    %21 = arith.sitofp %20 : vector<1x64xi32> to vector<1x64xf32>
    %c0_i32_4 = arith.constant 0 : i32
    %22 = vector.broadcast %c0_i32_4 : i32 to vector<1x64xi32>
    %23 = arith.cmpi ne, %17, %22 : vector<1x64xi32>
    %24 = arith.extui %23 : vector<1x64xi1> to vector<1x64xi32>
    %25 = arith.sitofp %24 : vector<1x64xi32> to vector<1x64xf32>
    %c0_5 = arith.constant 0 : index
    %c0_6 = arith.constant 0 : index
    %c0_7 = arith.constant 0 : index
    %c0_8 = arith.constant 0 : index
    %26 = vector.load %arg3[%c0_5, %c0_6, %c0_7, %c0_8] : memref<1x1x8x64xf32, #tpu.memory_space<vmem>>, vector<1x1x4x64xf32>
    %27 = vector.shape_cast %26 : vector<1x1x4x64xf32> to vector<4x64xf32>
    %c0_9 = arith.constant 0 : index
    %c0_10 = arith.constant 0 : index
    %c4 = arith.constant 4 : index
    %c0_11 = arith.constant 0 : index
    %28 = vector.load %arg3[%c0_9, %c0_10, %c4, %c0_11] : memref<1x1x8x64xf32, #tpu.memory_space<vmem>>, vector<1x1x4x64xf32>
    %29 = vector.shape_cast %28 : vector<1x1x4x64xf32> to vector<4x64xf32>
    %c0_12 = arith.constant 0 : index
    %c0_13 = arith.constant 0 : index
    %c0_14 = arith.constant 0 : index
    %c0_15 = arith.constant 0 : index
    %30 = vector.load %arg2[%c0_12, %c0_13, %c0_14, %c0_15] : memref<1x4x8x64xf32, #tpu.memory_space<vmem>>, vector<1x4x1x64xf32>
    %31 = vector.shape_cast %30 : vector<1x4x1x64xf32> to vector<4x64xf32>
    %c0_16 = arith.constant 0 : index
    %c0_17 = arith.constant 0 : index
    %c1 = arith.constant 1 : index
    %c0_18 = arith.constant 0 : index
    %32 = vector.load %arg2[%c0_16, %c0_17, %c1, %c0_18] : memref<1x4x8x64xf32, #tpu.memory_space<vmem>>, vector<1x4x1x64xf32>
    %33 = vector.shape_cast %32 : vector<1x4x1x64xf32> to vector<4x64xf32>
    %cst = arith.constant 0.000000e+00 : f32
    %34 = vector.broadcast %cst : f32 to vector<4x8xf32>
    %35 = vector.extract_strided_slice %31 {offsets = [0, 0], sizes = [4, 56], strides = [1, 1]} : vector<4x64xf32> to vector<4x56xf32>
    %36 = tpu.concatenate %34, %35 in 1 : vector<4x8xf32>, vector<4x56xf32> -> vector<4x64xf32>
    %cst_19 = arith.constant 0.000000e+00 : f32
    %37 = vector.broadcast %cst_19 : f32 to vector<4x8xf32>
    %38 = vector.extract_strided_slice %31 {offsets = [0, 8], sizes = [4, 56], strides = [1, 1]} : vector<4x64xf32> to vector<4x56xf32>
    %39 = tpu.concatenate %38, %37 in 1 : vector<4x56xf32>, vector<4x8xf32> -> vector<4x64xf32>
    %40 = vector.broadcast %21 : vector<1x64xf32> to vector<4x64xf32>
    %41 = arith.mulf %31, %40 : vector<4x64xf32>
    %cst_20 = arith.constant 0.000000e+00 : f32
    %42 = vector.broadcast %cst_20 : f32 to vector<4x1xf32>
    %43 = vector.extract_strided_slice %41 {offsets = [0, 0], sizes = [4, 63], strides = [1, 1]} : vector<4x64xf32> to vector<4x63xf32>
    %44 = tpu.concatenate %42, %43 in 1 : vector<4x1xf32>, vector<4x63xf32> -> vector<4x64xf32>
    %45 = vector.broadcast %25 : vector<1x64xf32> to vector<4x64xf32>
    %46 = arith.mulf %31, %45 : vector<4x64xf32>
    %cst_21 = arith.constant 0.000000e+00 : f32
    %47 = vector.broadcast %cst_21 : f32 to vector<4x1xf32>
    %48 = vector.extract_strided_slice %46 {offsets = [0, 1], sizes = [4, 63], strides = [1, 1]} : vector<4x64xf32> to vector<4x63xf32>
    %49 = tpu.concatenate %48, %47 in 1 : vector<4x63xf32>, vector<4x1xf32> -> vector<4x64xf32>
    %50 = tpu.concatenate %31, %27, %33, %36, %39, %44, %49 in 0 : vector<4x64xf32>, vector<4x64xf32>, vector<4x64xf32>, vector<4x64xf32>, vector<4x64xf32>, vector<4x64xf32>, vector<4x64xf32> -> vector<28x64xf32>
    %cst_22 = arith.constant dense<0.000000e+00> : vector<4x64xf32>
    %51 = tpu.matmul %0, %50, %cst_22 {dimension_numbers = #tpu.dot_dimension_numbers<[1], [0], [0], [1], [0, 0, 1, 1], [], []>} : vector<4x28xf32>, vector<28x64xf32>, vector<4x64xf32> -> vector<4x64xf32>
    %c0_23 = arith.constant 0 : index
    %c0_24 = arith.constant 0 : index
    %c0_25 = arith.constant 0 : index
    %c0_26 = arith.constant 0 : index
    %52 = vector.load %arg5[%c0_23, %c0_24, %c0_25, %c0_26] : memref<1x4x8x64xf32, #tpu.memory_space<vmem>>, vector<1x4x1x64xf32>
    %53 = vector.shape_cast %52 : vector<1x4x1x64xf32> to vector<4x64xf32>
    %54 = vector.shape_cast %51 : vector<4x64xf32> to vector<1x4x1x64xf32>
    tpu.vector_store %arg5[%c0_23, %c0_24, %c0_25, %c0_26], %54 {strides = array<i32>} : memref<1x4x8x64xf32, #tpu.memory_space<vmem>>, vector<1x4x1x64xf32>,
    %c0_27 = arith.constant 0 : index
    %c0_28 = arith.constant 0 : index
    %c1_29 = arith.constant 1 : index
    %c0_30 = arith.constant 0 : index
    %55 = vector.load %arg2[%c0_27, %c0_28, %c1_29, %c0_30] : memref<1x4x8x64xf32, #tpu.memory_space<vmem>>, vector<1x4x1x64xf32>
    %56 = vector.shape_cast %55 : vector<1x4x1x64xf32> to vector<4x64xf32>
    %c0_31 = arith.constant 0 : index
    %c0_32 = arith.constant 0 : index
    %c0_33 = arith.constant 0 : index
    %c0_34 = arith.constant 0 : index
    %57 = vector.load %arg2[%c0_31, %c0_32, %c0_33, %c0_34] : memref<1x4x8x64xf32, #tpu.memory_space<vmem>>, vector<1x4x1x64xf32>
    %58 = vector.shape_cast %57 : vector<1x4x1x64xf32> to vector<4x64xf32>
    %c0_35 = arith.constant 0 : index
    %c0_36 = arith.constant 0 : index
    %c2 = arith.constant 2 : index
    %c0_37 = arith.constant 0 : index
    %59 = vector.load %arg2[%c0_35, %c0_36, %c2, %c0_37] : memref<1x4x8x64xf32, #tpu.memory_space<vmem>>, vector<1x4x1x64xf32>
    %60 = vector.shape_cast %59 : vector<1x4x1x64xf32> to vector<4x64xf32>
    %cst_38 = arith.constant 0.000000e+00 : f32
    %61 = vector.broadcast %cst_38 : f32 to vector<4x8xf32>
    %62 = vector.extract_strided_slice %56 {offsets = [0, 0], sizes = [4, 56], strides = [1, 1]} : vector<4x64xf32> to vector<4x56xf32>
    %63 = tpu.concatenate %61, %62 in 1 : vector<4x8xf32>, vector<4x56xf32> -> vector<4x64xf32>
    %cst_39 = arith.constant 0.000000e+00 : f32
    %64 = vector.broadcast %cst_39 : f32 to vector<4x8xf32>
    %65 = vector.extract_strided_slice %56 {offsets = [0, 8], sizes = [4, 56], strides = [1, 1]} : vector<4x64xf32> to vector<4x56xf32>
    %66 = tpu.concatenate %65, %64 in 1 : vector<4x56xf32>, vector<4x8xf32> -> vector<4x64xf32>
    %67 = vector.broadcast %21 : vector<1x64xf32> to vector<4x64xf32>
    %68 = arith.mulf %56, %67 : vector<4x64xf32>
    %cst_40 = arith.constant 0.000000e+00 : f32
    %69 = vector.broadcast %cst_40 : f32 to vector<4x1xf32>
    %70 = vector.extract_strided_slice %68 {offsets = [0, 0], sizes = [4, 63], strides = [1, 1]} : vector<4x64xf32> to vector<4x63xf32>
    %71 = tpu.concatenate %69, %70 in 1 : vector<4x1xf32>, vector<4x63xf32> -> vector<4x64xf32>
    %72 = vector.broadcast %25 : vector<1x64xf32> to vector<4x64xf32>
    %73 = arith.mulf %56, %72 : vector<4x64xf32>
    %cst_41 = arith.constant 0.000000e+00 : f32
    %74 = vector.broadcast %cst_41 : f32 to vector<4x1xf32>
    %75 = vector.extract_strided_slice %73 {offsets = [0, 1], sizes = [4, 63], strides = [1, 1]} : vector<4x64xf32> to vector<4x63xf32>
    %76 = tpu.concatenate %75, %74 in 1 : vector<4x63xf32>, vector<4x1xf32> -> vector<4x64xf32>
    %77 = tpu.concatenate %56, %58, %60, %63, %66, %71, %76 in 0 : vector<4x64xf32>, vector<4x64xf32>, vector<4x64xf32>, vector<4x64xf32>, vector<4x64xf32>, vector<4x64xf32>, vector<4x64xf32> -> vector<28x64xf32>
    %cst_42 = arith.constant dense<0.000000e+00> : vector<4x64xf32>
    %78 = tpu.matmul %0, %77, %cst_42 {dimension_numbers = #tpu.dot_dimension_numbers<[1], [0], [0], [1], [0, 0, 1, 1], [], []>} : vector<4x28xf32>, vector<28x64xf32>, vector<4x64xf32> -> vector<4x64xf32>
    %c0_43 = arith.constant 0 : index
    %c0_44 = arith.constant 0 : index
    %c1_45 = arith.constant 1 : index
    %c0_46 = arith.constant 0 : index
    %79 = vector.load %arg5[%c0_43, %c0_44, %c1_45, %c0_46] : memref<1x4x8x64xf32, #tpu.memory_space<vmem>>, vector<1x4x1x64xf32>
    %80 = vector.shape_cast %79 : vector<1x4x1x64xf32> to vector<4x64xf32>
    %81 = vector.shape_cast %78 : vector<4x64xf32> to vector<1x4x1x64xf32>
    tpu.vector_store %arg5[%c0_43, %c0_44, %c1_45, %c0_46], %81 {strides = array<i32>} : memref<1x4x8x64xf32, #tpu.memory_space<vmem>>, vector<1x4x1x64xf32>,
    %c0_47 = arith.constant 0 : index
    %c0_48 = arith.constant 0 : index
    %c2_49 = arith.constant 2 : index
    %c0_50 = arith.constant 0 : index
    %82 = vector.load %arg2[%c0_47, %c0_48, %c2_49, %c0_50] : memref<1x4x8x64xf32, #tpu.memory_space<vmem>>, vector<1x4x1x64xf32>
    %83 = vector.shape_cast %82 : vector<1x4x1x64xf32> to vector<4x64xf32>
    %c0_51 = arith.constant 0 : index
    %c0_52 = arith.constant 0 : index
    %c1_53 = arith.constant 1 : index
    %c0_54 = arith.constant 0 : index
    %84 = vector.load %arg2[%c0_51, %c0_52, %c1_53, %c0_54] : memref<1x4x8x64xf32, #tpu.memory_space<vmem>>, vector<1x4x1x64xf32>
    %85 = vector.shape_cast %84 : vector<1x4x1x64xf32> to vector<4x64xf32>
    %c0_55 = arith.constant 0 : index
    %c0_56 = arith.constant 0 : index
    %c3 = arith.constant 3 : index
    %c0_57 = arith.constant 0 : index
    %86 = vector.load %arg2[%c0_55, %c0_56, %c3, %c0_57] : memref<1x4x8x64xf32, #tpu.memory_space<vmem>>, vector<1x4x1x64xf32>
    %87 = vector.shape_cast %86 : vector<1x4x1x64xf32> to vector<4x64xf32>
    %cst_58 = arith.constant 0.000000e+00 : f32
    %88 = vector.broadcast %cst_58 : f32 to vector<4x8xf32>
    %89 = vector.extract_strided_slice %83 {offsets = [0, 0], sizes = [4, 56], strides = [1, 1]} : vector<4x64xf32> to vector<4x56xf32>
    %90 = tpu.concatenate %88, %89 in 1 : vector<4x8xf32>, vector<4x56xf32> -> vector<4x64xf32>
    %cst_59 = arith.constant 0.000000e+00 : f32
    %91 = vector.broadcast %cst_59 : f32 to vector<4x8xf32>
    %92 = vector.extract_strided_slice %83 {offsets = [0, 8], sizes = [4, 56], strides = [1, 1]} : vector<4x64xf32> to vector<4x56xf32>
    %93 = tpu.concatenate %92, %91 in 1 : vector<4x56xf32>, vector<4x8xf32> -> vector<4x64xf32>
    %94 = vector.broadcast %21 : vector<1x64xf32> to vector<4x64xf32>
    %95 = arith.mulf %83, %94 : vector<4x64xf32>
    %cst_60 = arith.constant 0.000000e+00 : f32
    %96 = vector.broadcast %cst_60 : f32 to vector<4x1xf32>
    %97 = vector.extract_strided_slice %95 {offsets = [0, 0], sizes = [4, 63], strides = [1, 1]} : vector<4x64xf32> to vector<4x63xf32>
    %98 = tpu.concatenate %96, %97 in 1 : vector<4x1xf32>, vector<4x63xf32> -> vector<4x64xf32>
    %99 = vector.broadcast %25 : vector<1x64xf32> to vector<4x64xf32>
    %100 = arith.mulf %83, %99 : vector<4x64xf32>
    %cst_61 = arith.constant 0.000000e+00 : f32
    %101 = vector.broadcast %cst_61 : f32 to vector<4x1xf32>
    %102 = vector.extract_strided_slice %100 {offsets = [0, 1], sizes = [4, 63], strides = [1, 1]} : vector<4x64xf32> to vector<4x63xf32>
    %103 = tpu.concatenate %102, %101 in 1 : vector<4x63xf32>, vector<4x1xf32> -> vector<4x64xf32>
    %104 = tpu.concatenate %83, %85, %87, %90, %93, %98, %103 in 0 : vector<4x64xf32>, vector<4x64xf32>, vector<4x64xf32>, vector<4x64xf32>, vector<4x64xf32>, vector<4x64xf32>, vector<4x64xf32> -> vector<28x64xf32>
    %cst_62 = arith.constant dense<0.000000e+00> : vector<4x64xf32>
    %105 = tpu.matmul %0, %104, %cst_62 {dimension_numbers = #tpu.dot_dimension_numbers<[1], [0], [0], [1], [0, 0, 1, 1], [], []>} : vector<4x28xf32>, vector<28x64xf32>, vector<4x64xf32> -> vector<4x64xf32>
    %c0_63 = arith.constant 0 : index
    %c0_64 = arith.constant 0 : index
    %c2_65 = arith.constant 2 : index
    %c0_66 = arith.constant 0 : index
    %106 = vector.load %arg5[%c0_63, %c0_64, %c2_65, %c0_66] : memref<1x4x8x64xf32, #tpu.memory_space<vmem>>, vector<1x4x1x64xf32>
    %107 = vector.shape_cast %106 : vector<1x4x1x64xf32> to vector<4x64xf32>
    %108 = vector.shape_cast %105 : vector<4x64xf32> to vector<1x4x1x64xf32>
    tpu.vector_store %arg5[%c0_63, %c0_64, %c2_65, %c0_66], %108 {strides = array<i32>} : memref<1x4x8x64xf32, #tpu.memory_space<vmem>>, vector<1x4x1x64xf32>,
    %c0_67 = arith.constant 0 : index
    %c0_68 = arith.constant 0 : index
    %c3_69 = arith.constant 3 : index
    %c0_70 = arith.constant 0 : index
    %109 = vector.load %arg2[%c0_67, %c0_68, %c3_69, %c0_70] : memref<1x4x8x64xf32, #tpu.memory_space<vmem>>, vector<1x4x1x64xf32>
    %110 = vector.shape_cast %109 : vector<1x4x1x64xf32> to vector<4x64xf32>
    %c0_71 = arith.constant 0 : index
    %c0_72 = arith.constant 0 : index
    %c2_73 = arith.constant 2 : index
    %c0_74 = arith.constant 0 : index
    %111 = vector.load %arg2[%c0_71, %c0_72, %c2_73, %c0_74] : memref<1x4x8x64xf32, #tpu.memory_space<vmem>>, vector<1x4x1x64xf32>
    %112 = vector.shape_cast %111 : vector<1x4x1x64xf32> to vector<4x64xf32>
    %c0_75 = arith.constant 0 : index
    %c0_76 = arith.constant 0 : index
    %c4_77 = arith.constant 4 : index
    %c0_78 = arith.constant 0 : index
    %113 = vector.load %arg2[%c0_75, %c0_76, %c4_77, %c0_78] : memref<1x4x8x64xf32, #tpu.memory_space<vmem>>, vector<1x4x1x64xf32>
    %114 = vector.shape_cast %113 : vector<1x4x1x64xf32> to vector<4x64xf32>
    %cst_79 = arith.constant 0.000000e+00 : f32
    %115 = vector.broadcast %cst_79 : f32 to vector<4x8xf32>
    %116 = vector.extract_strided_slice %110 {offsets = [0, 0], sizes = [4, 56], strides = [1, 1]} : vector<4x64xf32> to vector<4x56xf32>
    %117 = tpu.concatenate %115, %116 in 1 : vector<4x8xf32>, vector<4x56xf32> -> vector<4x64xf32>
    %cst_80 = arith.constant 0.000000e+00 : f32
    %118 = vector.broadcast %cst_80 : f32 to vector<4x8xf32>
    %119 = vector.extract_strided_slice %110 {offsets = [0, 8], sizes = [4, 56], strides = [1, 1]} : vector<4x64xf32> to vector<4x56xf32>
    %120 = tpu.concatenate %119, %118 in 1 : vector<4x56xf32>, vector<4x8xf32> -> vector<4x64xf32>
    %121 = vector.broadcast %21 : vector<1x64xf32> to vector<4x64xf32>
    %122 = arith.mulf %110, %121 : vector<4x64xf32>
    %cst_81 = arith.constant 0.000000e+00 : f32
    %123 = vector.broadcast %cst_81 : f32 to vector<4x1xf32>
    %124 = vector.extract_strided_slice %122 {offsets = [0, 0], sizes = [4, 63], strides = [1, 1]} : vector<4x64xf32> to vector<4x63xf32>
    %125 = tpu.concatenate %123, %124 in 1 : vector<4x1xf32>, vector<4x63xf32> -> vector<4x64xf32>
    %126 = vector.broadcast %25 : vector<1x64xf32> to vector<4x64xf32>
    %127 = arith.mulf %110, %126 : vector<4x64xf32>
    %cst_82 = arith.constant 0.000000e+00 : f32
    %128 = vector.broadcast %cst_82 : f32 to vector<4x1xf32>
    %129 = vector.extract_strided_slice %127 {offsets = [0, 1], sizes = [4, 63], strides = [1, 1]} : vector<4x64xf32> to vector<4x63xf32>
    %130 = tpu.concatenate %129, %128 in 1 : vector<4x63xf32>, vector<4x1xf32> -> vector<4x64xf32>
    %131 = tpu.concatenate %110, %112, %114, %117, %120, %125, %130 in 0 : vector<4x64xf32>, vector<4x64xf32>, vector<4x64xf32>, vector<4x64xf32>, vector<4x64xf32>, vector<4x64xf32>, vector<4x64xf32> -> vector<28x64xf32>
    %cst_83 = arith.constant dense<0.000000e+00> : vector<4x64xf32>
    %132 = tpu.matmul %0, %131, %cst_83 {dimension_numbers = #tpu.dot_dimension_numbers<[1], [0], [0], [1], [0, 0, 1, 1], [], []>} : vector<4x28xf32>, vector<28x64xf32>, vector<4x64xf32> -> vector<4x64xf32>
    %c0_84 = arith.constant 0 : index
    %c0_85 = arith.constant 0 : index
    %c3_86 = arith.constant 3 : index
    %c0_87 = arith.constant 0 : index
    %133 = vector.load %arg5[%c0_84, %c0_85, %c3_86, %c0_87] : memref<1x4x8x64xf32, #tpu.memory_space<vmem>>, vector<1x4x1x64xf32>
    %134 = vector.shape_cast %133 : vector<1x4x1x64xf32> to vector<4x64xf32>
    %135 = vector.shape_cast %132 : vector<4x64xf32> to vector<1x4x1x64xf32>
    tpu.vector_store %arg5[%c0_84, %c0_85, %c3_86, %c0_87], %135 {strides = array<i32>} : memref<1x4x8x64xf32, #tpu.memory_space<vmem>>, vector<1x4x1x64xf32>,
    %c0_88 = arith.constant 0 : index
    %c0_89 = arith.constant 0 : index
    %c4_90 = arith.constant 4 : index
    %c0_91 = arith.constant 0 : index
    %136 = vector.load %arg2[%c0_88, %c0_89, %c4_90, %c0_91] : memref<1x4x8x64xf32, #tpu.memory_space<vmem>>, vector<1x4x1x64xf32>
    %137 = vector.shape_cast %136 : vector<1x4x1x64xf32> to vector<4x64xf32>
    %c0_92 = arith.constant 0 : index
    %c0_93 = arith.constant 0 : index
    %c3_94 = arith.constant 3 : index
    %c0_95 = arith.constant 0 : index
    %138 = vector.load %arg2[%c0_92, %c0_93, %c3_94, %c0_95] : memref<1x4x8x64xf32, #tpu.memory_space<vmem>>, vector<1x4x1x64xf32>
    %139 = vector.shape_cast %138 : vector<1x4x1x64xf32> to vector<4x64xf32>
    %c0_96 = arith.constant 0 : index
    %c0_97 = arith.constant 0 : index
    %c5 = arith.constant 5 : index
    %c0_98 = arith.constant 0 : index
    %140 = vector.load %arg2[%c0_96, %c0_97, %c5, %c0_98] : memref<1x4x8x64xf32, #tpu.memory_space<vmem>>, vector<1x4x1x64xf32>
    %141 = vector.shape_cast %140 : vector<1x4x1x64xf32> to vector<4x64xf32>
    %cst_99 = arith.constant 0.000000e+00 : f32
    %142 = vector.broadcast %cst_99 : f32 to vector<4x8xf32>
    %143 = vector.extract_strided_slice %137 {offsets = [0, 0], sizes = [4, 56], strides = [1, 1]} : vector<4x64xf32> to vector<4x56xf32>
    %144 = tpu.concatenate %142, %143 in 1 : vector<4x8xf32>, vector<4x56xf32> -> vector<4x64xf32>
    %cst_100 = arith.constant 0.000000e+00 : f32
    %145 = vector.broadcast %cst_100 : f32 to vector<4x8xf32>
    %146 = vector.extract_strided_slice %137 {offsets = [0, 8], sizes = [4, 56], strides = [1, 1]} : vector<4x64xf32> to vector<4x56xf32>
    %147 = tpu.concatenate %146, %145 in 1 : vector<4x56xf32>, vector<4x8xf32> -> vector<4x64xf32>
    %148 = vector.broadcast %21 : vector<1x64xf32> to vector<4x64xf32>
    %149 = arith.mulf %137, %148 : vector<4x64xf32>
    %cst_101 = arith.constant 0.000000e+00 : f32
    %150 = vector.broadcast %cst_101 : f32 to vector<4x1xf32>
    %151 = vector.extract_strided_slice %149 {offsets = [0, 0], sizes = [4, 63], strides = [1, 1]} : vector<4x64xf32> to vector<4x63xf32>
    %152 = tpu.concatenate %150, %151 in 1 : vector<4x1xf32>, vector<4x63xf32> -> vector<4x64xf32>
    %153 = vector.broadcast %25 : vector<1x64xf32> to vector<4x64xf32>
    %154 = arith.mulf %137, %153 : vector<4x64xf32>
    %cst_102 = arith.constant 0.000000e+00 : f32
    %155 = vector.broadcast %cst_102 : f32 to vector<4x1xf32>
    %156 = vector.extract_strided_slice %154 {offsets = [0, 1], sizes = [4, 63], strides = [1, 1]} : vector<4x64xf32> to vector<4x63xf32>
    %157 = tpu.concatenate %156, %155 in 1 : vector<4x63xf32>, vector<4x1xf32> -> vector<4x64xf32>
    %158 = tpu.concatenate %137, %139, %141, %144, %147, %152, %157 in 0 : vector<4x64xf32>, vector<4x64xf32>, vector<4x64xf32>, vector<4x64xf32>, vector<4x64xf32>, vector<4x64xf32>, vector<4x64xf32> -> vector<28x64xf32>
    %cst_103 = arith.constant dense<0.000000e+00> : vector<4x64xf32>
    %159 = tpu.matmul %0, %158, %cst_103 {dimension_numbers = #tpu.dot_dimension_numbers<[1], [0], [0], [1], [0, 0, 1, 1], [], []>} : vector<4x28xf32>, vector<28x64xf32>, vector<4x64xf32> -> vector<4x64xf32>
    %c0_104 = arith.constant 0 : index
    %c0_105 = arith.constant 0 : index
    %c4_106 = arith.constant 4 : index
    %c0_107 = arith.constant 0 : index
    %160 = vector.load %arg5[%c0_104, %c0_105, %c4_106, %c0_107] : memref<1x4x8x64xf32, #tpu.memory_space<vmem>>, vector<1x4x1x64xf32>
    %161 = vector.shape_cast %160 : vector<1x4x1x64xf32> to vector<4x64xf32>
    %162 = vector.shape_cast %159 : vector<4x64xf32> to vector<1x4x1x64xf32>
    tpu.vector_store %arg5[%c0_104, %c0_105, %c4_106, %c0_107], %162 {strides = array<i32>} : memref<1x4x8x64xf32, #tpu.memory_space<vmem>>, vector<1x4x1x64xf32>,
    %c0_108 = arith.constant 0 : index
    %c0_109 = arith.constant 0 : index
    %c5_110 = arith.constant 5 : index
    %c0_111 = arith.constant 0 : index
    %163 = vector.load %arg2[%c0_108, %c0_109, %c5_110, %c0_111] : memref<1x4x8x64xf32, #tpu.memory_space<vmem>>, vector<1x4x1x64xf32>
    %164 = vector.shape_cast %163 : vector<1x4x1x64xf32> to vector<4x64xf32>
    %c0_112 = arith.constant 0 : index
    %c0_113 = arith.constant 0 : index
    %c4_114 = arith.constant 4 : index
    %c0_115 = arith.constant 0 : index
    %165 = vector.load %arg2[%c0_112, %c0_113, %c4_114, %c0_115] : memref<1x4x8x64xf32, #tpu.memory_space<vmem>>, vector<1x4x1x64xf32>
    %166 = vector.shape_cast %165 : vector<1x4x1x64xf32> to vector<4x64xf32>
    %c0_116 = arith.constant 0 : index
    %c0_117 = arith.constant 0 : index
    %c6 = arith.constant 6 : index
    %c0_118 = arith.constant 0 : index
    %167 = vector.load %arg2[%c0_116, %c0_117, %c6, %c0_118] : memref<1x4x8x64xf32, #tpu.memory_space<vmem>>, vector<1x4x1x64xf32>
    %168 = vector.shape_cast %167 : vector<1x4x1x64xf32> to vector<4x64xf32>
    %cst_119 = arith.constant 0.000000e+00 : f32
    %169 = vector.broadcast %cst_119 : f32 to vector<4x8xf32>
    %170 = vector.extract_strided_slice %164 {offsets = [0, 0], sizes = [4, 56], strides = [1, 1]} : vector<4x64xf32> to vector<4x56xf32>
    %171 = tpu.concatenate %169, %170 in 1 : vector<4x8xf32>, vector<4x56xf32> -> vector<4x64xf32>
    %cst_120 = arith.constant 0.000000e+00 : f32
    %172 = vector.broadcast %cst_120 : f32 to vector<4x8xf32>
    %173 = vector.extract_strided_slice %164 {offsets = [0, 8], sizes = [4, 56], strides = [1, 1]} : vector<4x64xf32> to vector<4x56xf32>
    %174 = tpu.concatenate %173, %172 in 1 : vector<4x56xf32>, vector<4x8xf32> -> vector<4x64xf32>
    %175 = vector.broadcast %21 : vector<1x64xf32> to vector<4x64xf32>
    %176 = arith.mulf %164, %175 : vector<4x64xf32>
    %cst_121 = arith.constant 0.000000e+00 : f32
    %177 = vector.broadcast %cst_121 : f32 to vector<4x1xf32>
    %178 = vector.extract_strided_slice %176 {offsets = [0, 0], sizes = [4, 63], strides = [1, 1]} : vector<4x64xf32> to vector<4x63xf32>
    %179 = tpu.concatenate %177, %178 in 1 : vector<4x1xf32>, vector<4x63xf32> -> vector<4x64xf32>
    %180 = vector.broadcast %25 : vector<1x64xf32> to vector<4x64xf32>
    %181 = arith.mulf %164, %180 : vector<4x64xf32>
    %cst_122 = arith.constant 0.000000e+00 : f32
    %182 = vector.broadcast %cst_122 : f32 to vector<4x1xf32>
    %183 = vector.extract_strided_slice %181 {offsets = [0, 1], sizes = [4, 63], strides = [1, 1]} : vector<4x64xf32> to vector<4x63xf32>
    %184 = tpu.concatenate %183, %182 in 1 : vector<4x63xf32>, vector<4x1xf32> -> vector<4x64xf32>
    %185 = tpu.concatenate %164, %166, %168, %171, %174, %179, %184 in 0 : vector<4x64xf32>, vector<4x64xf32>, vector<4x64xf32>, vector<4x64xf32>, vector<4x64xf32>, vector<4x64xf32>, vector<4x64xf32> -> vector<28x64xf32>
    %cst_123 = arith.constant dense<0.000000e+00> : vector<4x64xf32>
    %186 = tpu.matmul %0, %185, %cst_123 {dimension_numbers = #tpu.dot_dimension_numbers<[1], [0], [0], [1], [0, 0, 1, 1], [], []>} : vector<4x28xf32>, vector<28x64xf32>, vector<4x64xf32> -> vector<4x64xf32>
    %c0_124 = arith.constant 0 : index
    %c0_125 = arith.constant 0 : index
    %c5_126 = arith.constant 5 : index
    %c0_127 = arith.constant 0 : index
    %187 = vector.load %arg5[%c0_124, %c0_125, %c5_126, %c0_127] : memref<1x4x8x64xf32, #tpu.memory_space<vmem>>, vector<1x4x1x64xf32>
    %188 = vector.shape_cast %187 : vector<1x4x1x64xf32> to vector<4x64xf32>
    %189 = vector.shape_cast %186 : vector<4x64xf32> to vector<1x4x1x64xf32>
    tpu.vector_store %arg5[%c0_124, %c0_125, %c5_126, %c0_127], %189 {strides = array<i32>} : memref<1x4x8x64xf32, #tpu.memory_space<vmem>>, vector<1x4x1x64xf32>,
    %c0_128 = arith.constant 0 : index
    %c0_129 = arith.constant 0 : index
    %c6_130 = arith.constant 6 : index
    %c0_131 = arith.constant 0 : index
    %190 = vector.load %arg2[%c0_128, %c0_129, %c6_130, %c0_131] : memref<1x4x8x64xf32, #tpu.memory_space<vmem>>, vector<1x4x1x64xf32>
    %191 = vector.shape_cast %190 : vector<1x4x1x64xf32> to vector<4x64xf32>
    %c0_132 = arith.constant 0 : index
    %c0_133 = arith.constant 0 : index
    %c5_134 = arith.constant 5 : index
    %c0_135 = arith.constant 0 : index
    %192 = vector.load %arg2[%c0_132, %c0_133, %c5_134, %c0_135] : memref<1x4x8x64xf32, #tpu.memory_space<vmem>>, vector<1x4x1x64xf32>
    %193 = vector.shape_cast %192 : vector<1x4x1x64xf32> to vector<4x64xf32>
    %c0_136 = arith.constant 0 : index
    %c0_137 = arith.constant 0 : index
    %c7 = arith.constant 7 : index
    %c0_138 = arith.constant 0 : index
    %194 = vector.load %arg2[%c0_136, %c0_137, %c7, %c0_138] : memref<1x4x8x64xf32, #tpu.memory_space<vmem>>, vector<1x4x1x64xf32>
    %195 = vector.shape_cast %194 : vector<1x4x1x64xf32> to vector<4x64xf32>
    %cst_139 = arith.constant 0.000000e+00 : f32
    %196 = vector.broadcast %cst_139 : f32 to vector<4x8xf32>
    %197 = vector.extract_strided_slice %191 {offsets = [0, 0], sizes = [4, 56], strides = [1, 1]} : vector<4x64xf32> to vector<4x56xf32>
    %198 = tpu.concatenate %196, %197 in 1 : vector<4x8xf32>, vector<4x56xf32> -> vector<4x64xf32>
    %cst_140 = arith.constant 0.000000e+00 : f32
    %199 = vector.broadcast %cst_140 : f32 to vector<4x8xf32>
    %200 = vector.extract_strided_slice %191 {offsets = [0, 8], sizes = [4, 56], strides = [1, 1]} : vector<4x64xf32> to vector<4x56xf32>
    %201 = tpu.concatenate %200, %199 in 1 : vector<4x56xf32>, vector<4x8xf32> -> vector<4x64xf32>
    %202 = vector.broadcast %21 : vector<1x64xf32> to vector<4x64xf32>
    %203 = arith.mulf %191, %202 : vector<4x64xf32>
    %cst_141 = arith.constant 0.000000e+00 : f32
    %204 = vector.broadcast %cst_141 : f32 to vector<4x1xf32>
    %205 = vector.extract_strided_slice %203 {offsets = [0, 0], sizes = [4, 63], strides = [1, 1]} : vector<4x64xf32> to vector<4x63xf32>
    %206 = tpu.concatenate %204, %205 in 1 : vector<4x1xf32>, vector<4x63xf32> -> vector<4x64xf32>
    %207 = vector.broadcast %25 : vector<1x64xf32> to vector<4x64xf32>
    %208 = arith.mulf %191, %207 : vector<4x64xf32>
    %cst_142 = arith.constant 0.000000e+00 : f32
    %209 = vector.broadcast %cst_142 : f32 to vector<4x1xf32>
    %210 = vector.extract_strided_slice %208 {offsets = [0, 1], sizes = [4, 63], strides = [1, 1]} : vector<4x64xf32> to vector<4x63xf32>
    %211 = tpu.concatenate %210, %209 in 1 : vector<4x63xf32>, vector<4x1xf32> -> vector<4x64xf32>
    %212 = tpu.concatenate %191, %193, %195, %198, %201, %206, %211 in 0 : vector<4x64xf32>, vector<4x64xf32>, vector<4x64xf32>, vector<4x64xf32>, vector<4x64xf32>, vector<4x64xf32>, vector<4x64xf32> -> vector<28x64xf32>
    %cst_143 = arith.constant dense<0.000000e+00> : vector<4x64xf32>
    %213 = tpu.matmul %0, %212, %cst_143 {dimension_numbers = #tpu.dot_dimension_numbers<[1], [0], [0], [1], [0, 0, 1, 1], [], []>} : vector<4x28xf32>, vector<28x64xf32>, vector<4x64xf32> -> vector<4x64xf32>
    %c0_144 = arith.constant 0 : index
    %c0_145 = arith.constant 0 : index
    %c6_146 = arith.constant 6 : index
    %c0_147 = arith.constant 0 : index
    %214 = vector.load %arg5[%c0_144, %c0_145, %c6_146, %c0_147] : memref<1x4x8x64xf32, #tpu.memory_space<vmem>>, vector<1x4x1x64xf32>
    %215 = vector.shape_cast %214 : vector<1x4x1x64xf32> to vector<4x64xf32>
    %216 = vector.shape_cast %213 : vector<4x64xf32> to vector<1x4x1x64xf32>
    tpu.vector_store %arg5[%c0_144, %c0_145, %c6_146, %c0_147], %216 {strides = array<i32>} : memref<1x4x8x64xf32, #tpu.memory_space<vmem>>, vector<1x4x1x64xf32>,
    %c0_148 = arith.constant 0 : index
    %c0_149 = arith.constant 0 : index
    %c7_150 = arith.constant 7 : index
    %c0_151 = arith.constant 0 : index
    %217 = vector.load %arg2[%c0_148, %c0_149, %c7_150, %c0_151] : memref<1x4x8x64xf32, #tpu.memory_space<vmem>>, vector<1x4x1x64xf32>
    %218 = vector.shape_cast %217 : vector<1x4x1x64xf32> to vector<4x64xf32>
    %c0_152 = arith.constant 0 : index
    %c0_153 = arith.constant 0 : index
    %c6_154 = arith.constant 6 : index
    %c0_155 = arith.constant 0 : index
    %219 = vector.load %arg2[%c0_152, %c0_153, %c6_154, %c0_155] : memref<1x4x8x64xf32, #tpu.memory_space<vmem>>, vector<1x4x1x64xf32>
    %220 = vector.shape_cast %219 : vector<1x4x1x64xf32> to vector<4x64xf32>
    %cst_156 = arith.constant 0.000000e+00 : f32
    %221 = vector.broadcast %cst_156 : f32 to vector<4x8xf32>
    %222 = vector.extract_strided_slice %218 {offsets = [0, 0], sizes = [4, 56], strides = [1, 1]} : vector<4x64xf32> to vector<4x56xf32>
    %223 = tpu.concatenate %221, %222 in 1 : vector<4x8xf32>, vector<4x56xf32> -> vector<4x64xf32>
    %cst_157 = arith.constant 0.000000e+00 : f32
    %224 = vector.broadcast %cst_157 : f32 to vector<4x8xf32>
    %225 = vector.extract_strided_slice %218 {offsets = [0, 8], sizes = [4, 56], strides = [1, 1]} : vector<4x64xf32> to vector<4x56xf32>
    %226 = tpu.concatenate %225, %224 in 1 : vector<4x56xf32>, vector<4x8xf32> -> vector<4x64xf32>
    %227 = vector.broadcast %21 : vector<1x64xf32> to vector<4x64xf32>
    %228 = arith.mulf %218, %227 : vector<4x64xf32>
    %cst_158 = arith.constant 0.000000e+00 : f32
    %229 = vector.broadcast %cst_158 : f32 to vector<4x1xf32>
    %230 = vector.extract_strided_slice %228 {offsets = [0, 0], sizes = [4, 63], strides = [1, 1]} : vector<4x64xf32> to vector<4x63xf32>
    %231 = tpu.concatenate %229, %230 in 1 : vector<4x1xf32>, vector<4x63xf32> -> vector<4x64xf32>
    %232 = vector.broadcast %25 : vector<1x64xf32> to vector<4x64xf32>
    %233 = arith.mulf %218, %232 : vector<4x64xf32>
    %cst_159 = arith.constant 0.000000e+00 : f32
    %234 = vector.broadcast %cst_159 : f32 to vector<4x1xf32>
    %235 = vector.extract_strided_slice %233 {offsets = [0, 1], sizes = [4, 63], strides = [1, 1]} : vector<4x64xf32> to vector<4x63xf32>
    %236 = tpu.concatenate %235, %234 in 1 : vector<4x63xf32>, vector<4x1xf32> -> vector<4x64xf32>
    %237 = tpu.concatenate %218, %220, %29, %223, %226, %231, %236 in 0 : vector<4x64xf32>, vector<4x64xf32>, vector<4x64xf32>, vector<4x64xf32>, vector<4x64xf32>, vector<4x64xf32>, vector<4x64xf32> -> vector<28x64xf32>
    %cst_160 = arith.constant dense<0.000000e+00> : vector<4x64xf32>
    %238 = tpu.matmul %0, %237, %cst_160 {dimension_numbers = #tpu.dot_dimension_numbers<[1], [0], [0], [1], [0, 0, 1, 1], [], []>} : vector<4x28xf32>, vector<28x64xf32>, vector<4x64xf32> -> vector<4x64xf32>
    %c0_161 = arith.constant 0 : index
    %c0_162 = arith.constant 0 : index
    %c7_163 = arith.constant 7 : index
    %c0_164 = arith.constant 0 : index
    %239 = vector.load %arg5[%c0_161, %c0_162, %c7_163, %c0_164] : memref<1x4x8x64xf32, #tpu.memory_space<vmem>>, vector<1x4x1x64xf32>
    %240 = vector.shape_cast %239 : vector<1x4x1x64xf32> to vector<4x64xf32>
    %241 = vector.shape_cast %238 : vector<4x64xf32> to vector<1x4x1x64xf32>
    tpu.vector_store %arg5[%c0_161, %c0_162, %c7_163, %c0_164], %241 {strides = array<i32>} : memref<1x4x8x64xf32, #tpu.memory_space<vmem>>, vector<1x4x1x64xf32>,
    return
  }
  func.func @transform_0(%arg0: i32, %arg1: i32) -> (i32, i32, i32, i32) {
    %c0_i32 = arith.constant 0 : i32
    %c0_i32_0 = arith.constant 0 : i32
    %c0_i32_1 = arith.constant 0 : i32
    return %arg0, %c0_i32, %arg1, %c0_i32_0 : i32, i32, i32, i32
  }
  func.func @transform_1(%arg0: i32, %arg1: i32) -> (i32, i32, i32, i32) {
    %c0_i32 = arith.constant 0 : i32
    %c0_i32_0 = arith.constant 0 : i32
    %c0_i32_1 = arith.constant 0 : i32
    return %arg0, %arg1, %c0_i32, %c0_i32_0 : i32, i32, i32, i32
  }
  func.func @transform_2(%arg0: i32, %arg1: i32) -> (i32, i32) {
    %c0_i32 = arith.constant 0 : i32
    %c0_i32_0 = arith.constant 0 : i32
    %c0_i32_1 = arith.constant 0 : i32
    return %c0_i32, %c0_i32_0 : i32, i32
  }
  func.func @transform_3(%arg0: i32, %arg1: i32) -> (i32, i32, i32, i32) {
    %c0_i32 = arith.constant 0 : i32
    %c0_i32_0 = arith.constant 0 : i32
    %c0_i32_1 = arith.constant 0 : i32
    return %arg0, %c0_i32, %arg1, %c0_i32_0 : i32, i32, i32, i32
  }
}

</mosaic_0001>

<llo_original>
// kernel: reconv_pallas.1
$region0: #{reconv_pallas.1}
  #allocation0 [shape = 'u32[]', space=smem, size = 0x4, offset = 0x4, fixed_abs, tag = 'smem constant byte address 0x4 - core index']
  #allocation1 [shape = 'u32[144,128]{1,0:T(1,128)}', space=vmem, size = 0x12000, scoped, tag = 'internal scratch']
  %s0 = inlined_call_operand.vmem [shape: f32[2,4,16,64], index: 0, kind: input, shape index: {}]
  %s1 = inlined_call_operand.vmem [shape: f32[2,2,8,64], index: 1, kind: input, shape index: {}]
  %s2 = inlined_call_operand.vmem [shape: f32[4,28], index: 2, kind: input, shape index: {}]
  %s3 = inlined_call_operand.vmem [shape: f32[2,4,16,64], index: 3, kind: output, shape index: {}]
  %s4 = sld [smem:[#allocation0]]
  $region117: #{reconv_pallas.1} parent=0
    _
  %s6 = ssub.s32 1, %s4
  %s7 = scalar_select 0, %s6, %s4
  $region1: #{reconv_pallas.1} parent=0
    #allocation2 [shape = 'u8[32768]{0}', space=vmem, size = 0x8000, scoped, tag = 'input window, operand 0']
    #allocation3 [shape = 'u8[32768]{0}', space=vmem, size = 0x8000, scoped, tag = 'output window, operand 0']
    loop: start=0, step=1, limit=6
    $region2: #{reconv_pallas.1} parent=1 // loop_pre_header
      _
    $region3: #{reconv_pallas.1} parent=1 // loop_header
      %s9 = sphi 0, %s13
      %p10 = scmp.ge.s32.totalorder %s9, 6
      %s16 = sphi 0, %s28
      %s17 = sphi 0, %s24
      %s18 = sphi 0, %s16
      %s19 = sphi 0, %s17
      %s20 = sphi 0, %s18
      %s21 = sphi 0, %s19
      %s33 = sphi 0, %s35
      %s36 = sphi 0, %s33
      %s37 = sphi 0, %s36
      %s53 = sphi 0, %s37
      %s61 = sphi 0, %s63
      %s64 = sphi 0, %s61
      %s65 = sphi 0, %s64
      %s81 = sphi 0, %s65
      %s85 = sphi 0, %s85
      %s87 = sphi 0, %s85
      %s88 = sphi 0, %s87
      %s102 = sphi 0, %s88
      %s110 = sphi 0, %s112
      %s113 = sphi 0, %s110
      %s114 = sphi 0, %s113
      %s130 = sphi 0, %s114
    $region4: #{reconv_pallas.1} parent=1 // loop_header_branch
      %12 = sbr.rel (%p10) target = $region8
    $region5: #{reconv_pallas.1} parent=1 // loop_body
      %s14 = ssub.s32 %s9, 1
      %s15 = ssub.s32 %s9, 2
      %s22 = sadd.s32 1, %s17
      %p23 = scmp.ge.s32.totalorder %s22, 2
      %s24 = scalar_select %p23, 0, %s22
      %s25 = sadd.s32 1, %s16
      %s26 = scalar_select %p23, %s25, %s16
      %p27 = scmp.ge.s32.totalorder %s26, 2
      %s28 = scalar_select %p27, 0, %s26
      %s29 = ssub.s32 %s16, %s28
      %s30 = ssub.s32 %s17, %s24
      %s31 = sor.u32 %s29, %s30
      %p32 = scmp.eq.s32.totalorder %s31, 0
      %s34 = sadd.s32 %s33, 1
      %s35 = scalar_select %p32, %s33, %s34
      %p38 = pneg %p32
      %p39 = scmp.eq.s32.totalorder %s9, 3
      %p40 = por %p38, %p39
      %p41 = scmp.ne.s32.totalorder %s33, %s36
      %p42 = scmp.eq.s32.totalorder %s9, 0
      %p43 = por %p41, %p42
      %p44 = scmp.ne.s32.totalorder %s33, %s36
      %p45 = scmp.eq.s32.totalorder %s14, 3
      %p46 = por %p44, %p45
      %p47 = scmp.ne.s32.totalorder %s36, %s37
      %p48 = scmp.eq.s32.totalorder %s14, 0
      %p49 = por %p47, %p48
      %p50 = scmp.ne.s32.totalorder %s36, %s37
      %p51 = scmp.eq.s32.totalorder %s15, 3
      %p52 = por %p50, %p51
      %p54 = scmp.ne.s32.totalorder %s37, %s53
      %p55 = scmp.eq.s32.totalorder %s15, 0
      %p56 = por %p54, %p55
      %s57 = ssub.s32 %s16, %s28
      %s58 = ssub.s32 %s17, %s24
      %s59 = sor.u32 %s57, %s58
      %p60 = scmp.eq.s32.totalorder %s59, 0
      %s62 = sadd.s32 %s61, 1
      %s63 = scalar_select %p60, %s61, %s62
      %p66 = pneg %p60
      %p67 = scmp.eq.s32.totalorder %s9, 3
      %p68 = por %p66, %p67
      %p69 = scmp.ne.s32.totalorder %s61, %s64
      %p70 = scmp.eq.s32.totalorder %s9, 0
      %p71 = por %p69, %p70
      %p72 = scmp.ne.s32.totalorder %s61, %s64
      %p73 = scmp.eq.s32.totalorder %s14, 3
      %p74 = por %p72, %p73
      %p75 = scmp.ne.s32.totalorder %s64, %s65
      %p76 = scmp.eq.s32.totalorder %s14, 0
      %p77 = por %p75, %p76
      %p78 = scmp.ne.s32.totalorder %s64, %s65
      %p79 = scmp.eq.s32.totalorder %s15, 3
      %p80 = por %p78, %p79
      %p82 = scmp.ne.s32.totalorder %s65, %s81
      %p83 = scmp.eq.s32.totalorder %s15, 0
      %p84 = por %p82, %p83
      %s86 = sadd.s32 %s85, 1
      %p89 = scmp.eq.s32.totalorder %s9, 3
      %p90 = scmp.ne.s32.totalorder %s85, %s87
      %p91 = scmp.eq.s32.totalorder %s9, 0
      %p92 = por %p90, %p91
      %p93 = scmp.ne.s32.totalorder %s85, %s87
      %p94 = scmp.eq.s32.totalorder %s14, 3
      %p95 = por %p93, %p94
      %p96 = scmp.ne.s32.totalorder %s87, %s88
      %p97 = scmp.eq.s32.totalorder %s14, 0
      %p98 = por %p96, %p97
      %p99 = scmp.ne.s32.totalorder %s87, %s88
      %p100 = scmp.eq.s32.totalorder %s15, 3
      %p101 = por %p99, %p100
      %p103 = scmp.ne.s32.totalorder %s88, %s102
      %p104 = scmp.eq.s32.totalorder %s15, 0
      %p105 = por %p103, %p104
      %s106 = ssub.s32 %s16, %s28
      %s107 = ssub.s32 %s17, %s24
      %s108 = sor.u32 %s106, %s107
      %p109 = scmp.eq.s32.totalorder %s108, 0
      %s111 = sadd.s32 %s110, 1
      %s112 = scalar_select %p109, %s110, %s111
      %p115 = pneg %p109
      %p116 = scmp.eq.s32.totalorder %s9, 3
      %p117 = por %p115, %p116
      %p118 = scmp.ne.s32.totalorder %s110, %s113
      %p119 = scmp.eq.s32.totalorder %s9, 0
      %p120 = por %p118, %p119
      %p121 = scmp.ne.s32.totalorder %s110, %s113
      %p122 = scmp.eq.s32.totalorder %s14, 3
      %p123 = por %p121, %p122
      %p124 = scmp.ne.s32.totalorder %s113, %s114
      %p125 = scmp.eq.s32.totalorder %s14, 0
      %p126 = por %p124, %p125
      %p127 = scmp.ne.s32.totalorder %s113, %s114
      %p128 = scmp.eq.s32.totalorder %s15, 3
      %p129 = por %p127, %p128
      %p131 = scmp.ne.s32.totalorder %s114, %s130
      %p132 = scmp.eq.s32.totalorder %s15, 0
      %p133 = por %p131, %p132
      %p134 = scmp.le.s32.totalorder 1, %s9
      %p135 = scmp.lt.s32.totalorder %s9, 5
      %p136 = pnand %p134, %p135
      %p137 = pneg %p136
      // Predicated region
      $region9: #{reconv_pallas.1} parent=5 // pred_check
        _
      $region10: #{reconv_pallas.1} parent=5 // pred_check_branch
        %139 = sbr.rel (%p136) target = $region12
      $region11: #{reconv_pallas.1} parent=5 // pred_region
        %s140 = ssub.s32 %s9, 1
        // Predicated region
        $region13: #{reconv_pallas.1} parent=11 // pred_check
          %p141 = pneg %p98
        $region14: #{reconv_pallas.1} parent=11 // pred_check_branch
          %143 = sbr.rel (%p141) target = $region16
        $region15: #{reconv_pallas.1} parent=11 // pred_region
          _
        $region16: #{reconv_pallas.1} parent=11 // pred_fallthru
          _
      $region12: #{reconv_pallas.1} parent=5 // pred_fallthru
        _
      %p144 = scmp.lt.s32.totalorder %s9, 4
      // Predicated region
      $region17: #{reconv_pallas.1} parent=5 // pred_check
        %p145 = pneg %p144
      $region18: #{reconv_pallas.1} parent=5 // pred_check_branch
        %147 = sbr.rel (%p145) target = $region20
      $region19: #{reconv_pallas.1} parent=5 // pred_region
        // Predicated region
        $region21: #{reconv_pallas.1} parent=19 // pred_check
          %p148 = pneg %p43
        $region22: #{reconv_pallas.1} parent=19 // pred_check_branch
          %150 = sbr.rel (%p148) target = $region24
        $region23: #{reconv_pallas.1} parent=19 // pred_region
          %s151 = sand.u32 %s33, 1
          %s152 = sand.u32 %s33, 1
          %s153 = smul.addr %s152, 32
          %s154 = scalar_lea.vmem [#allocation2], %s153
          %s155 = smul.addr %s16, 8
          %s156 = sadd.s32 %s17, %s155
          %s157 = smul.addr %s156, 8
          %s158 = scalar_lea.vmem %s0, %s157
          // Predicated region
          $region25: #{reconv_pallas.1} parent=23 // pred_check
            _
          $region26: #{reconv_pallas.1} parent=23 // pred_check_branch
            %160 = sbr.rel (0) target = $region28
          $region27: #{reconv_pallas.1} parent=23 // pred_region
            // Predicated region
            $region29: #{reconv_pallas.1} parent=27 // pred_check
              _
            $region30: #{reconv_pallas.1} parent=27 // pred_check_branch
              %162 = sbr.rel (0) target = $region32
            $region31: #{reconv_pallas.1} parent=27 // pred_region
              // Predicated region
              $region44: #{reconv_pallas.1} parent=31 // pred_check
                _
              $region45: #{reconv_pallas.1} parent=31 // pred_check_branch
                %183 = sbr.rel (0) target = $region47
              $region46: #{reconv_pallas.1} parent=31 // pred_region
                loop: start=0, step=1, limit=1
                $region48: #{reconv_pallas.1} parent=46 // loop_pre_header
                  _
                $region49: #{reconv_pallas.1} parent=46 // loop_header
                  %s185 = sphi 0, %s189
                  %p186 = scmp.ge.s32.totalorder %s185, 1
                  %s190 = sphi %s158, %s158
                  %s191 = sphi %s154, %s154
                $region50: #{reconv_pallas.1} parent=46 // loop_header_branch
                  %188 = sbr.rel (%p186) target = $region54
                $region51: #{reconv_pallas.1} parent=46 // loop_body
                  %v192 = vld [vmem:[%s190] sm:$0xff]
                  %193 = vst [vmem:[%s191] sm:$0xff] %v192
                  %v194 = vld [vmem:[%s190 + $0x10] sm:$0xff]
                  %195 = vst [vmem:[%s191 + $0x8] sm:$0xff] %v194
                  %v196 = vld [vmem:[%s190 + $0x20] sm:$0xff]
                  %197 = vst [vmem:[%s191 + $0x10] sm:$0xff] %v196
                  %v198 = vld [vmem:[%s190 + $0x30] sm:$0xff]
                  %199 = vst [vmem:[%s191 + $0x18] sm:$0xff] %v198
                $region52: #{reconv_pallas.1} parent=46 // loop_footer
                  %s189 = sadd.s32 1, %s185
                $region53: #{reconv_pallas.1} parent=46 // loop_footer_branch
                  %184 = sbr.rel target = $region49
                $region54: #{reconv_pallas.1} parent=46 // loop_exit
                  _
              $region47: #{reconv_pallas.1} parent=31 // pred_fallthru
                _
              // Predicated region
              $region55: #{reconv_pallas.1} parent=31 // pred_check
                _
              $region56: #{reconv_pallas.1} parent=31 // pred_check_branch
                %201 = sbr.rel target = $region58
              $region57: #{reconv_pallas.1} parent=31 // pred_region
                _
              $region58: #{reconv_pallas.1} parent=31 // pred_fallthru
                _
            $region32: #{reconv_pallas.1} parent=27 // pred_fallthru
              _
            // Predicated region
            $region33: #{reconv_pallas.1} parent=27 // pred_check
              _
            $region34: #{reconv_pallas.1} parent=27 // pred_check_branch
              %164 = sbr.rel target = $region36
            $region35: #{reconv_pallas.1} parent=27 // pred_region
              loop: start=0, step=1, limit=1
              $region37: #{reconv_pallas.1} parent=35 // loop_pre_header
                _
              $region38: #{reconv_pallas.1} parent=35 // loop_header
                %s167 = sphi 0, %s171
                %p168 = scmp.ge.s32.totalorder %s167, 1
                %s172 = sphi %s158, %s158
                %s173 = sphi %s154, %s154
              $region39: #{reconv_pallas.1} parent=35 // loop_header_branch
                %170 = sbr.rel (%p168) target = $region43
              $region40: #{reconv_pallas.1} parent=35 // loop_body
                %v174 = vld [vmem:[%s172] sm:$0xff]
                %175 = vst [vmem:[%s173] sm:$0xff] %v174
                %v176 = vld [vmem:[%s172 + $0x10] sm:$0xff]
                %177 = vst [vmem:[%s173 + $0x8] sm:$0xff] %v176
                %v178 = vld [vmem:[%s172 + $0x20] sm:$0xff]
                %179 = vst [vmem:[%s173 + $0x10] sm:$0xff] %v178
                %v180 = vld [vmem:[%s172 + $0x30] sm:$0xff]
                %181 = vst [vmem:[%s173 + $0x18] sm:$0xff] %v180
              $region41: #{reconv_pallas.1} parent=35 // loop_footer
                %s171 = sadd.s32 1, %s167
              $region42: #{reconv_pallas.1} parent=35 // loop_footer_branch
                %166 = sbr.rel target = $region38
              $region43: #{reconv_pallas.1} parent=35 // loop_exit
                _
            $region36: #{reconv_pallas.1} parent=27 // pred_fallthru
              _
          $region28: #{reconv_pallas.1} parent=23 // pred_fallthru
            _
          %202 = vnop
        $region24: #{reconv_pallas.1} parent=19 // pred_fallthru
          _
        // Predicated region
        $region59: #{reconv_pallas.1} parent=19 // pred_check
          %p203 = pneg %p71
        $region60: #{reconv_pallas.1} parent=19 // pred_check_branch
          %205 = sbr.rel (%p203) target = $region62
        $region61: #{reconv_pallas.1} parent=19 // pred_region
          %p206 = scmp.lt.s32.totalorder %s16, 1
          %s207 = scalar_select %p206, %s16, 1
          %p208 = scmp.lt.s32.totalorder %s17, 1
          %s209 = scalar_select %p208, %s17, 1
          %s210 = smul.addr %s207, 2
          %s211 = sadd.s32 %s209, %s210
          %s212 = smul.addr %s211, 8
          %s213 = scalar_lea.vmem %s1, %s212
        $region62: #{reconv_pallas.1} parent=19 // pred_fallthru
          _
      $region20: #{reconv_pallas.1} parent=5 // pred_fallthru
        _
      %p214 = scmp.le.s32.totalorder 1, %s9
      %p215 = scmp.lt.s32.totalorder %s9, 5
      %p216 = pnand %p214, %p215
      %p217 = pneg %p216
      // Predicated region
      $region63: #{reconv_pallas.1} parent=5 // pred_check
        _
      $region64: #{reconv_pallas.1} parent=5 // pred_check_branch
        %219 = sbr.rel (%p216) target = $region66
      $region65: #{reconv_pallas.1} parent=5 // pred_region
        %s220 = ssub.s32 %s9, 1
        %s221 = sand.u32 %s36, 1
        %s222 = sand.u32 %s36, 1
        %s223 = smul.addr %s222, 32
        %s224 = scalar_lea.vmem [#allocation2], %s223
        // Predicated region
        $region67: #{reconv_pallas.1} parent=65 // pred_check
          %p225 = pneg %p49
        $region68: #{reconv_pallas.1} parent=65 // pred_check_branch
          %227 = sbr.rel (%p225) target = $region70
        $region69: #{reconv_pallas.1} parent=65 // pred_region
          _
        $region70: #{reconv_pallas.1} parent=65 // pred_fallthru
          _
        %s228 = sand.u32 %s36, 1
        %s229 = sand.u32 %s36, 1
        %s230 = smul.addr %s229, 32
        %s231 = scalar_lea.vmem [#allocation2], %s230
        %p232 = pneg %p49
        %p233 = pneg %p46
        %p234 = scmp.lt.s32.totalorder %s18, 1
        %s235 = scalar_select %p234, %s18, 1
        %p236 = scmp.lt.s32.totalorder %s19, 1
        %s237 = scalar_select %p236, %s19, 1
        %s238 = smul.addr %s235, 2
        %s239 = sadd.s32 %s237, %s238
        %s240 = smul.addr %s239, 8
        %s241 = scalar_lea.vmem %s1, %s240
        %p242 = pneg %p77
        %p243 = pneg %p74
        %p244 = pneg %p98
        %p245 = pneg %p95
        %p246 = pneg %p126
        %p247 = pneg %p123
        %s248 = sand.u32 %s113, 1
        %s249 = sand.u32 %s113, 1
        %s250 = smul.addr %s249, 32
        %s251 = scalar_lea.vmem [#allocation3], %s250
        %p252 = scmp.lt.s32.totalorder %s18, 1
        %s253 = scalar_select %p252, %s18, 1
        %p254 = scmp.lt.s32.totalorder %s19, 1
        %s255 = scalar_select %p254, %s19, 1
        %s256 = smul.addr %s253, 2
        %s257 = sadd.s32 %s255, %s256
        %s258 = smul.addr %s257, 8
        %s259 = scalar_lea.vmem %s1, %s258
        %v260 = vld [vmem:[%s2] sm:$0xf]
        %v261 = vlaneseq
        %v262 = vand.u32 %v261, 127
        %vm263 = vcmp.lt.s32.totalorder %v262, 0
        %v264 = vsub.s32 0, %v262
        %v265 = vsel %vm263, %v264, %v262
        %v266 = vshrl.u32 %v265, 3
        %v267 = vand.u32 %v265, 7
        %v268 = vsub.s32 0, %v267
        %v269 = vsel %vm263, %v268, %v267
        %vm270 = vcmp.ne.s32.totalorder %v269, 0
        %vm271 = vcmp.lt.s32.totalorder %v269, 0
        %vm272 = vmand %vm271, %vm270
        %v273 = vadd.s32 %v269, 8
        %v274 = vsel %vm272, %v273, %v269
        %vm275 = vcmp.ne.s32.totalorder %v274, 7
        %v276 = vsel %vm275, 1, 0
        %v277 = vcvt.s32.f32 %v276
        %vm278 = vcmp.ne.s32.totalorder %v274, 0
        %v279 = vsel %vm278, 1, 0
        %v280 = vcvt.s32.f32 %v279
        %v281 = vld [vmem:[%s259] sm:$0xf]
        %v282 = vld [vmem:[%s259 + $0x4] sm:$0xf]
        %v283 = vld [vmem:[%s224] sm:$0x1]
        %v284 = vld [vmem:[%s224 + $0x8] sm:$0x1]
        %v285 = vld [vmem:[%s224 + $0x10] sm:$0x1]
        %v286 = vld [vmem:[%s224 + $0x18] sm:$0x1]
        %v287 = vld [vmem:[%s224 + $0x1] sm:$0x1]
        %v288 = vld [vmem:[%s224 + $0x9] sm:$0x1]
        %v289 = vld [vmem:[%s224 + $0x11] sm:$0x1]
        %v290 = vld [vmem:[%s224 + $0x19] sm:$0x1]
        %v295 = vrot.slane %v284, 7
        %vm296 = vcmask 1041409
        %v297 = vsel %vm296, %v295, %v283
        %v298 = vrot.slane %v285, 6
        %vm299 = vcmask 1042434
        %v300 = vsel %vm299, %v298, %v297
        %v301 = vrot.slane %v286, 5
        %vm302 = vcmask 1043459
        %v303 = vsel %vm302, %v301, %v300
        %304 = vrot.lane.b32.xlu0 %v303, 8
        %v305 = vpop.permute.xlu0 %304
        %vm307 = vcmask 64512
        %v308 = vsel %vm307, 0.0, %v305
        %309 = vrot.lane.b32.xlu0 %v303, 120
        %v310 = vpop.permute.xlu0 %309
        %vm312 = vcmask 457728
        %v313 = vsel %vm312, %v310, 0.0
        %v314 = vmul.f32 %v283, %v277
        %v315 = vmul.f32 %v284, %v277
        %v316 = vmul.f32 %v285, %v277
        %v317 = vmul.f32 %v286, %v277
        %v322 = vrot.slane %v315, 7
        %v323 = vsel %vm296, %v322, %v314
        %v324 = vrot.slane %v316, 6
        %v325 = vsel %vm299, %v324, %v323
        %v326 = vrot.slane %v317, 5
        %v327 = vsel %vm302, %v326, %v325
        %328 = vrot.lane.b32.xlu0 %v327, 1
        %v329 = vpop.permute.xlu0 %328
        %vm331 = vcmask 7168
        %v332 = vsel %vm331, 0.0, %v329
        %v333 = vmul.f32 %v283, %v280
        %v334 = vmul.f32 %v284, %v280
        %v335 = vmul.f32 %v285, %v280
        %v336 = vmul.f32 %v286, %v280
        %v341 = vrot.slane %v334, 7
        %v342 = vsel %vm296, %v341, %v333
        %v343 = vrot.slane %v335, 6
        %v344 = vsel %vm299, %v343, %v342
        %v345 = vrot.slane %v336, 5
        %v346 = vsel %vm302, %v345, %v344
        %347 = vrot.lane.b32.xlu0 %v346, 127
        %v348 = vpop.permute.xlu0 %347
        %vm350 = vcmask 515072
        %v351 = vsel %vm350, %v348, 0.0
        %v354 = vrot.slane %v281, 4
        %v360 = vrot.slane %v288, 7
        %v361 = vsel %vm296, %v360, %v287
        %v362 = vrot.slane %v289, 6
        %v363 = vsel %vm299, %v362, %v361
        %v364 = vrot.slane %v290, 5
        %v365 = vsel %vm302, %v364, %v363
        %v368 = vrot.slane %v308, 4
        %v371 = vrot.slane %v332, 4
        %vm373 = vcmask 1043456
        %v374 = vsel %vm373, %v303, %v354
        %v375 = vsel %vm373, %v365, %v368
        %v376 = vsel %vm373, %v313, %v371
        %vm377 = vcmask 228352
        %v379 = vsel %vm377, %v260, 0
        %v382 = vsel %vm373, %v351, 0
        %384 = vmatprep.subr.mxu0 0.0
        %385 = vmatpush1.msra.mxu0 %v374
        %386 = vmatprep.subr.mxu0 0.0
        %387 = vmatpush1.msra.mxu0 %v375
        %388 = vmatprep.subr.mxu0 0.0
        %389 = vmatpush1.msra.mxu0 %v376
        %390 = vmatprep.subr.mxu0 0.0
        %391 = vmatpush1.msra.mxu0 %v382
        %392 = vmatprep.subr.mxu0 0.0
        %393 = vmatpush1.msra.mxu0 0.0
        %394 = vmatprep.subr.mxu0 0.0
        %395 = vmatpush1.msra.mxu0 0.0
        %396 = vmatprep.subr.mxu0 0.0
        %397 = vmatpush1.msra.mxu0 0.0
        %398 = vmatprep.subr.mxu0 0.0
        %399 = vmatpush1.msra.mxu0 0.0
        %400 = vmatprep.subr.mxu0 0.0
        %401 = vmatpush1.msra.mxu0 0.0
        %402 = vmatprep.subr.mxu0 0.0
        %403 = vmatpush1.msra.mxu0 0.0
        %404 = vmatprep.subr.mxu0 0.0
        %405 = vmatpush1.msra.mxu0 0.0
        %406 = vmatprep.subr.mxu0 0.0
        %407 = vmatpush1.msra.mxu0 0.0
        %408 = vmatprep.subr.mxu0 0.0
        %409 = vmatpush1.msra.mxu0 0.0
        %410 = vmatprep.subr.mxu0 0.0
        %411 = vmatpush1.msra.mxu0 0.0
        %412 = vmatprep.subr.mxu0 0.0
        %413 = vmatpush1.msra.mxu0 0.0
        %414 = vmatprep.subr.mxu0 0.0
        %415 = vmatpush1.msra.mxu0 0.0
        %416 = vmatprep.subr.mxu0 0.0
        %417 = vmatpush1.msra.mxu0 0.0
        %418 = vmatprep.subr.mxu0 0.0
        %419 = vmatpush1.msra.mxu0 0.0
        %420 = vmatprep.subr.mxu0 0.0
        %421 = vmatpush1.msra.mxu0 0.0
        %422 = vmatprep.subr.mxu0 0.0
        %423 = vmatpush1.msra.mxu0 0.0
        %424 = vmatprep.subr.mxu0 0.0
        %425 = vmatpush1.msra.mxu0 0.0
        %426 = vmatprep.subr.mxu0 0.0
        %427 = vmatpush1.msra.mxu0 0.0
        %428 = vmatprep.subr.mxu0 0.0
        %429 = vmatpush1.msra.mxu0 0.0
        %430 = vmatprep.subr.mxu0 0.0
        %431 = vmatpush1.msra.mxu0 0.0
        %432 = vmatprep.subr.mxu0 0.0
        %433 = vmatpush1.msra.mxu0 0.0
        %434 = vmatprep.subr.mxu0 0.0
        %435 = vmatpush1.msra.mxu0 0.0
        %436 = vmatprep.subr.mxu0 0.0
        %437 = vmatpush1.msra.mxu0 0.0
        %438 = vmatprep.subr.mxu0 0.0
        %439 = vmatpush1.msra.mxu0 0.0
        %440 = vmatprep.subr.mxu0 0.0
        %441 = vmatpush1.msra.mxu0 0.0
        %442 = vmatprep.subr.mxu0 0.0
        %443 = vmatpush1.msra.mxu0 0.0
        %444 = vmatprep.subr.mxu0 0.0
        %445 = vmatpush1.msra.mxu0 0.0
        %446 = vmatprep.subr.mxu0 0.0
        %447 = vmatpush1.msra.mxu0 0.0
        %448 = vmatprep.mubr.f32.mxu0 0.0
        %449 = vmatmul.mubr.f32.gmra.mrb[0].mxu0 %v379
        %v450 = vpop.f32.mrb[0].mxu0
        %v451 = vadd.f32 0.0, %v450
        %v452 = vpop.f32.mrb[0].mxu0
        %453 = vdwg.mxu0
        %v456 = vunpack.c.l.s4 1966171168
        %v457 = vunpack.c.0.s8 %v456
        %v458 = vlaneseq
        %v459 = vshrl.u32 %v458, 7
        %v460 = vsub.s32 %v457, %v459
        %v461 = vrot.slane %v451, %v460
        %v462 = vcombine.high %v461, %v461
        %v464 = vunpack.c.l.s4 1966171168
        %v465 = vunpack.c.0.s8 %v464
        %v466 = vlaneseq
        %v467 = vshrl.u32 %v466, 7
        %v468 = vsub.s32 %v465, %v467
        %v469 = vrot.slane %v461, %v468
        %v471 = vunpack.c.l.s4 1966171168
        %v472 = vunpack.c.0.s8 %v471
        %v473 = vlaneseq
        %v474 = vshrl.u32 %v473, 7
        %v475 = vsub.s32 %v472, %v474
        %v476 = vrot.slane %v462, %v475
        %v477 = vcombine.high %v469, %v469
        %v478 = vcombine.high %v476, %v476
        %vm483 = vcmask 516096
        %484 = vst.msk [vmem:[%s251] sm:$0x1] %vm483, %v469
        %485 = vst.msk [vmem:[%s251 + $0x8] sm:$0x1] %vm483, %v476
        %486 = vst.msk [vmem:[%s251 + $0x10] sm:$0x1] %vm483, %v477
        %487 = vst.msk [vmem:[%s251 + $0x18] sm:$0x1] %vm483, %v478
        %v488 = vld [vmem:[%s224 + $0x1] sm:$0x1]
        %v489 = vld [vmem:[%s224 + $0x9] sm:$0x1]
        %v490 = vld [vmem:[%s224 + $0x11] sm:$0x1]
        %v491 = vld [vmem:[%s224 + $0x19] sm:$0x1]
        %v492 = vld [vmem:[%s224] sm:$0x1]
        %v493 = vld [vmem:[%s224 + $0x8] sm:$0x1]
        %v494 = vld [vmem:[%s224 + $0x10] sm:$0x1]
        %v495 = vld [vmem:[%s224 + $0x18] sm:$0x1]
        %v496 = vld [vmem:[%s224 + $0x2] sm:$0x1]
        %v497 = vld [vmem:[%s224 + $0xa] sm:$0x1]
        %v498 = vld [vmem:[%s224 + $0x12] sm:$0x1]
        %v499 = vld [vmem:[%s224 + $0x1a] sm:$0x1]
        %v504 = vrot.slane %v489, 7
        %v505 = vsel %vm296, %v504, %v488
        %v506 = vrot.slane %v490, 6
        %v507 = vsel %vm299, %v506, %v505
        %v508 = vrot.slane %v491, 5
        %v509 = vsel %vm302, %v508, %v507
        %510 = vrot.lane.b32.xlu0 %v509, 8
        %v511 = vpop.permute.xlu0 %510
        %v513 = vsel %vm307, 0.0, %v511
        %514 = vrot.lane.b32.xlu0 %v509, 120
        %v515 = vpop.permute.xlu0 %514
        %v517 = vsel %vm312, %v515, 0.0
        %v518 = vmul.f32 %v488, %v277
        %v519 = vmul.f32 %v489, %v277
        %v520 = vmul.f32 %v490, %v277
        %v521 = vmul.f32 %v491, %v277
        %v526 = vrot.slane %v519, 7
        %v527 = vsel %vm296, %v526, %v518
        %v528 = vrot.slane %v520, 6
        %v529 = vsel %vm299, %v528, %v527
        %v530 = vrot.slane %v521, 5
        %v531 = vsel %vm302, %v530, %v529
        %532 = vrot.lane.b32.xlu0 %v531, 1
        %v533 = vpop.permute.xlu0 %532
        %v535 = vsel %vm331, 0.0, %v533
        %v536 = vmul.f32 %v488, %v280
        %v537 = vmul.f32 %v489, %v280
        %v538 = vmul.f32 %v490, %v280
        %v539 = vmul.f32 %v491, %v280
        %v544 = vrot.slane %v537, 7
        %v545 = vsel %vm296, %v544, %v536
        %v546 = vrot.slane %v538, 6
        %v547 = vsel %vm299, %v546, %v545
        %v548 = vrot.slane %v539, 5
        %v549 = vsel %vm302, %v548, %v547
        %550 = vrot.lane.b32.xlu0 %v549, 127
        %v551 = vpop.permute.xlu0 %550
        %v553 = vsel %vm350, %v551, 0.0
        %v559 = vrot.slane %v492, 4
        %v560 = vrot.slane %v493, 3
        %vm561 = vcmask 1045509
        %v562 = vsel %vm561, %v560, %v559
        %v563 = vrot.slane %v494, 2
        %vm564 = vcmask 1046534
        %v565 = vsel %vm564, %v563, %v562
        %v566 = vrot.slane %v495, 1
        %vm567 = vcmask 1047559
        %v568 = vsel %vm567, %v566, %v565
        %v574 = vrot.slane %v497, 7
        %v575 = vsel %vm296, %v574, %v496
        %v576 = vrot.slane %v498, 6
        %v577 = vsel %vm299, %v576, %v575
        %v578 = vrot.slane %v499, 5
        %v579 = vsel %vm302, %v578, %v577
        %v582 = vrot.slane %v513, 4
        %v585 = vrot.slane %v535, 4
        %v587 = vsel %vm373, %v509, %v568
        %v588 = vsel %vm373, %v579, %v582
        %v589 = vsel %vm373, %v517, %v585
        %v591 = vsel %vm373, %v553, 0
        %593 = vmatprep.subr.mxu0 0.0
        %594 = vmatpush1.msra.mxu0 %v587
        %595 = vmatprep.subr.mxu0 0.0
        %596 = vmatpush1.msra.mxu0 %v588
        %597 = vmatprep.subr.mxu0 0.0
        %598 = vmatpush1.msra.mxu0 %v589
        %599 = vmatprep.subr.mxu0 0.0
        %600 = vmatpush1.msra.mxu0 %v591
        %601 = vmatprep.subr.mxu0 0.0
        %602 = vmatpush1.msra.mxu0 0.0
        %603 = vmatprep.subr.mxu0 0.0
        %604 = vmatpush1.msra.mxu0 0.0
        %605 = vmatprep.subr.mxu0 0.0
        %606 = vmatpush1.msra.mxu0 0.0
        %607 = vmatprep.subr.mxu0 0.0
        %608 = vmatpush1.msra.mxu0 0.0
        %609 = vmatprep.subr.mxu0 0.0
        %610 = vmatpush1.msra.mxu0 0.0
        %611 = vmatprep.subr.mxu0 0.0
        %612 = vmatpush1.msra.mxu0 0.0
        %613 = vmatprep.subr.mxu0 0.0
        %614 = vmatpush1.msra.mxu0 0.0
        %615 = vmatprep.subr.mxu0 0.0
        %616 = vmatpush1.msra.mxu0 0.0
        %617 = vmatprep.subr.mxu0 0.0
        %618 = vmatpush1.msra.mxu0 0.0
        %619 = vmatprep.subr.mxu0 0.0
        %620 = vmatpush1.msra.mxu0 0.0
        %621 = vmatprep.subr.mxu0 0.0
        %622 = vmatpush1.msra.mxu0 0.0
        %623 = vmatprep.subr.mxu0 0.0
        %624 = vmatpush1.msra.mxu0 0.0
        %625 = vmatprep.subr.mxu0 0.0
        %626 = vmatpush1.msra.mxu0 0.0
        %627 = vmatprep.subr.mxu0 0.0
        %628 = vmatpush1.msra.mxu0 0.0
        %629 = vmatprep.subr.mxu0 0.0
        %630 = vmatpush1.msra.mxu0 0.0
        %631 = vmatprep.subr.mxu0 0.0
        %632 = vmatpush1.msra.mxu0 0.0
        %633 = vmatprep.subr.mxu0 0.0
        %634 = vmatpush1.msra.mxu0 0.0
        %635 = vmatprep.subr.mxu0 0.0
        %636 = vmatpush1.msra.mxu0 0.0
        %637 = vmatprep.subr.mxu0 0.0
        %638 = vmatpush1.msra.mxu0 0.0
        %639 = vmatprep.subr.mxu0 0.0
        %640 = vmatpush1.msra.mxu0 0.0
        %641 = vmatprep.subr.mxu0 0.0
        %642 = vmatpush1.msra.mxu0 0.0
        %643 = vmatprep.subr.mxu0 0.0
        %644 = vmatpush1.msra.mxu0 0.0
        %645 = vmatprep.subr.mxu0 0.0
        %646 = vmatpush1.msra.mxu0 0.0
        %647 = vmatprep.subr.mxu0 0.0
        %648 = vmatpush1.msra.mxu0 0.0
        %649 = vmatprep.subr.mxu0 0.0
        %650 = vmatpush1.msra.mxu0 0.0
        %651 = vmatprep.subr.mxu0 0.0
        %652 = vmatpush1.msra.mxu0 0.0
        %653 = vmatprep.subr.mxu0 0.0
        %654 = vmatpush1.msra.mxu0 0.0
        %655 = vmatprep.subr.mxu0 0.0
        %656 = vmatpush1.msra.mxu0 0.0
        %657 = vmatprep.mubr.f32.mxu0 0.0
        %658 = vmatmul.mubr.f32.gmra.mrb[0].mxu0 %v379
        %v659 = vpop.f32.mrb[0].mxu0
        %v660 = vadd.f32 0.0, %v659
        %v661 = vpop.f32.mrb[0].mxu0
        %662 = vdwg.mxu0
        %v665 = vunpack.c.l.s4 1966171168
        %v666 = vunpack.c.0.s8 %v665
        %v667 = vlaneseq
        %v668 = vshrl.u32 %v667, 7
        %v669 = vsub.s32 %v666, %v668
        %v670 = vrot.slane %v660, %v669
        %v671 = vcombine.high %v670, %v670
        %v673 = vunpack.c.l.s4 1966171168
        %v674 = vunpack.c.0.s8 %v673
        %v675 = vlaneseq
        %v676 = vshrl.u32 %v675, 7
        %v677 = vsub.s32 %v674, %v676
        %v678 = vrot.slane %v670, %v677
        %v680 = vunpack.c.l.s4 1966171168
        %v681 = vunpack.c.0.s8 %v680
        %v682 = vlaneseq
        %v683 = vshrl.u32 %v682, 7
        %v684 = vsub.s32 %v681, %v683
        %v685 = vrot.slane %v671, %v684
        %v686 = vcombine.high %v678, %v678
        %v687 = vcombine.high %v685, %v685
        %692 = vst.msk [vmem:[%s251 + $0x1] sm:$0x1] %vm483, %v678
        %693 = vst.msk [vmem:[%s251 + $0x9] sm:$0x1] %vm483, %v685
        %694 = vst.msk [vmem:[%s251 + $0x11] sm:$0x1] %vm483, %v686
        %695 = vst.msk [vmem:[%s251 + $0x19] sm:$0x1] %vm483, %v687
        %v696 = vld [vmem:[%s224 + $0x2] sm:$0x1]
        %v697 = vld [vmem:[%s224 + $0xa] sm:$0x1]
        %v698 = vld [vmem:[%s224 + $0x12] sm:$0x1]
        %v699 = vld [vmem:[%s224 + $0x1a] sm:$0x1]
        %v700 = vld [vmem:[%s224 + $0x1] sm:$0x1]
        %v701 = vld [vmem:[%s224 + $0x9] sm:$0x1]
        %v702 = vld [vmem:[%s224 + $0x11] sm:$0x1]
        %v703 = vld [vmem:[%s224 + $0x19] sm:$0x1]
        %v704 = vld [vmem:[%s224 + $0x3] sm:$0x1]
        %v705 = vld [vmem:[%s224 + $0xb] sm:$0x1]
        %v706 = vld [vmem:[%s224 + $0x13] sm:$0x1]
        %v707 = vld [vmem:[%s224 + $0x1b] sm:$0x1]
        %v712 = vrot.slane %v697, 7
        %v713 = vsel %vm296, %v712, %v696
        %v714 = vrot.slane %v698, 6
        %v715 = vsel %vm299, %v714, %v713
        %v716 = vrot.slane %v699, 5
        %v717 = vsel %vm302, %v716, %v715
        %718 = vrot.lane.b32.xlu0 %v717, 8
        %v719 = vpop.permute.xlu0 %718
        %v721 = vsel %vm307, 0.0, %v719
        %722 = vrot.lane.b32.xlu0 %v717, 120
        %v723 = vpop.permute.xlu0 %722
        %v725 = vsel %vm312, %v723, 0.0
        %v726 = vmul.f32 %v696, %v277
        %v727 = vmul.f32 %v697, %v277
        %v728 = vmul.f32 %v698, %v277
        %v729 = vmul.f32 %v699, %v277
        %v734 = vrot.slane %v727, 7
        %v735 = vsel %vm296, %v734, %v726
        %v736 = vrot.slane %v728, 6
        %v737 = vsel %vm299, %v736, %v735
        %v738 = vrot.slane %v729, 5
        %v739 = vsel %vm302, %v738, %v737
        %740 = vrot.lane.b32.xlu0 %v739, 1
        %v741 = vpop.permute.xlu0 %740
        %v743 = vsel %vm331, 0.0, %v741
        %v744 = vmul.f32 %v696, %v280
        %v745 = vmul.f32 %v697, %v280
        %v746 = vmul.f32 %v698, %v280
        %v747 = vmul.f32 %v699, %v280
        %v752 = vrot.slane %v745, 7
        %v753 = vsel %vm296, %v752, %v744
        %v754 = vrot.slane %v746, 6
        %v755 = vsel %vm299, %v754, %v753
        %v756 = vrot.slane %v747, 5
        %v757 = vsel %vm302, %v756, %v755
        %758 = vrot.lane.b32.xlu0 %v757, 127
        %v759 = vpop.permute.xlu0 %758
        %v761 = vsel %vm350, %v759, 0.0
        %v767 = vrot.slane %v700, 4
        %v768 = vrot.slane %v701, 3
        %v769 = vsel %vm561, %v768, %v767
        %v770 = vrot.slane %v702, 2
        %v771 = vsel %vm564, %v770, %v769
        %v772 = vrot.slane %v703, 1
        %v773 = vsel %vm567, %v772, %v771
        %v779 = vrot.slane %v705, 7
        %v780 = vsel %vm296, %v779, %v704
        %v781 = vrot.slane %v706, 6
        %v782 = vsel %vm299, %v781, %v780
        %v783 = vrot.slane %v707, 5
        %v784 = vsel %vm302, %v783, %v782
        %v787 = vrot.slane %v721, 4
        %v790 = vrot.slane %v743, 4
        %v792 = vsel %vm373, %v717, %v773
        %v793 = vsel %vm373, %v784, %v787
        %v794 = vsel %vm373, %v725, %v790
        %v796 = vsel %vm373, %v761, 0
        %798 = vmatprep.subr.mxu0 0.0
        %799 = vmatpush1.msra.mxu0 %v792
        %800 = vmatprep.subr.mxu0 0.0
        %801 = vmatpush1.msra.mxu0 %v793
        %802 = vmatprep.subr.mxu0 0.0
        %803 = vmatpush1.msra.mxu0 %v794
        %804 = vmatprep.subr.mxu0 0.0
        %805 = vmatpush1.msra.mxu0 %v796
        %806 = vmatprep.subr.mxu0 0.0
        %807 = vmatpush1.msra.mxu0 0.0
        %808 = vmatprep.subr.mxu0 0.0
        %809 = vmatpush1.msra.mxu0 0.0
        %810 = vmatprep.subr.mxu0 0.0
        %811 = vmatpush1.msra.mxu0 0.0
        %812 = vmatprep.subr.mxu0 0.0
        %813 = vmatpush1.msra.mxu0 0.0
        %814 = vmatprep.subr.mxu0 0.0
        %815 = vmatpush1.msra.mxu0 0.0
        %816 = vmatprep.subr.mxu0 0.0
        %817 = vmatpush1.msra.mxu0 0.0
        %818 = vmatprep.subr.mxu0 0.0
        %819 = vmatpush1.msra.mxu0 0.0
        %820 = vmatprep.subr.mxu0 0.0
        %821 = vmatpush1.msra.mxu0 0.0
        %822 = vmatprep.subr.mxu0 0.0
        %823 = vmatpush1.msra.mxu0 0.0
        %824 = vmatprep.subr.mxu0 0.0
        %825 = vmatpush1.msra.mxu0 0.0
        %826 = vmatprep.subr.mxu0 0.0
        %827 = vmatpush1.msra.mxu0 0.0
        %828 = vmatprep.subr.mxu0 0.0
        %829 = vmatpush1.msra.mxu0 0.0
        %830 = vmatprep.subr.mxu0 0.0
        %831 = vmatpush1.msra.mxu0 0.0
        %832 = vmatprep.subr.mxu0 0.0
        %833 = vmatpush1.msra.mxu0 0.0
        %834 = vmatprep.subr.mxu0 0.0
        %835 = vmatpush1.msra.mxu0 0.0
        %836 = vmatprep.subr.mxu0 0.0
        %837 = vmatpush1.msra.mxu0 0.0
        %838 = vmatprep.subr.mxu0 0.0
        %839 = vmatpush1.msra.mxu0 0.0
        %840 = vmatprep.subr.mxu0 0.0
        %841 = vmatpush1.msra.mxu0 0.0
        %842 = vmatprep.subr.mxu0 0.0
        %843 = vmatpush1.msra.mxu0 0.0
        %844 = vmatprep.subr.mxu0 0.0
        %845 = vmatpush1.msra.mxu0 0.0
        %846 = vmatprep.subr.mxu0 0.0
        %847 = vmatpush1.msra.mxu0 0.0
        %848 = vmatprep.subr.mxu0 0.0
        %849 = vmatpush1.msra.mxu0 0.0
        %850 = vmatprep.subr.mxu0 0.0
        %851 = vmatpush1.msra.mxu0 0.0
        %852 = vmatprep.subr.mxu0 0.0
        %853 = vmatpush1.msra.mxu0 0.0
        %854 = vmatprep.subr.mxu0 0.0
        %855 = vmatpush1.msra.mxu0 0.0
        %856 = vmatprep.subr.mxu0 0.0
        %857 = vmatpush1.msra.mxu0 0.0
        %858 = vmatprep.subr.mxu0 0.0
        %859 = vmatpush1.msra.mxu0 0.0
        %860 = vmatprep.subr.mxu0 0.0
        %861 = vmatpush1.msra.mxu0 0.0
        %862 = vmatprep.mubr.f32.mxu0 0.0
        %863 = vmatmul.mubr.f32.gmra.mrb[0].mxu0 %v379
        %v864 = vpop.f32.mrb[0].mxu0
        %v865 = vadd.f32 0.0, %v864
        %v866 = vpop.f32.mrb[0].mxu0
        %867 = vdwg.mxu0
        %v870 = vunpack.c.l.s4 1966171168
        %v871 = vunpack.c.0.s8 %v870
        %v872 = vlaneseq
        %v873 = vshrl.u32 %v872, 7
        %v874 = vsub.s32 %v871, %v873
        %v875 = vrot.slane %v865, %v874
        %v876 = vcombine.high %v875, %v875
        %v878 = vunpack.c.l.s4 1966171168
        %v879 = vunpack.c.0.s8 %v878
        %v880 = vlaneseq
        %v881 = vshrl.u32 %v880, 7
        %v882 = vsub.s32 %v879, %v881
        %v883 = vrot.slane %v875, %v882
        %v885 = vunpack.c.l.s4 1966171168
        %v886 = vunpack.c.0.s8 %v885
        %v887 = vlaneseq
        %v888 = vshrl.u32 %v887, 7
        %v889 = vsub.s32 %v886, %v888
        %v890 = vrot.slane %v876, %v889
        %v891 = vcombine.high %v883, %v883
        %v892 = vcombine.high %v890, %v890
        %897 = vst.msk [vmem:[%s251 + $0x2] sm:$0x1] %vm483, %v883
        %898 = vst.msk [vmem:[%s251 + $0xa] sm:$0x1] %vm483, %v890
        %899 = vst.msk [vmem:[%s251 + $0x12] sm:$0x1] %vm483, %v891
        %900 = vst.msk [vmem:[%s251 + $0x1a] sm:$0x1] %vm483, %v892
        %v901 = vld [vmem:[%s224 + $0x3] sm:$0x1]
        %v902 = vld [vmem:[%s224 + $0xb] sm:$0x1]
        %v903 = vld [vmem:[%s224 + $0x13] sm:$0x1]
        %v904 = vld [vmem:[%s224 + $0x1b] sm:$0x1]
        %v905 = vld [vmem:[%s224 + $0x2] sm:$0x1]
        %v906 = vld [vmem:[%s224 + $0xa] sm:$0x1]
        %v907 = vld [vmem:[%s224 + $0x12] sm:$0x1]
        %v908 = vld [vmem:[%s224 + $0x1a] sm:$0x1]
        %v909 = vld [vmem:[%s224 + $0x4] sm:$0x1]
        %v910 = vld [vmem:[%s224 + $0xc] sm:$0x1]
        %v911 = vld [vmem:[%s224 + $0x14] sm:$0x1]
        %v912 = vld [vmem:[%s224 + $0x1c] sm:$0x1]
        %v917 = vrot.slane %v902, 7
        %v918 = vsel %vm296, %v917, %v901
        %v919 = vrot.slane %v903, 6
        %v920 = vsel %vm299, %v919, %v918
        %v921 = vrot.slane %v904, 5
        %v922 = vsel %vm302, %v921, %v920
        %923 = vrot.lane.b32.xlu0 %v922, 8
        %v924 = vpop.permute.xlu0 %923
        %v926 = vsel %vm307, 0.0, %v924
        %927 = vrot.lane.b32.xlu0 %v922, 120
        %v928 = vpop.permute.xlu0 %927
        %v930 = vsel %vm312, %v928, 0.0
        %v931 = vmul.f32 %v901, %v277
        %v932 = vmul.f32 %v902, %v277
        %v933 = vmul.f32 %v903, %v277
        %v934 = vmul.f32 %v904, %v277
        %v939 = vrot.slane %v932, 7
        %v940 = vsel %vm296, %v939, %v931
        %v941 = vrot.slane %v933, 6
        %v942 = vsel %vm299, %v941, %v940
        %v943 = vrot.slane %v934, 5
        %v944 = vsel %vm302, %v943, %v942
        %945 = vrot.lane.b32.xlu0 %v944, 1
        %v946 = vpop.permute.xlu0 %945
        %v948 = vsel %vm331, 0.0, %v946
        %v949 = vmul.f32 %v901, %v280
        %v950 = vmul.f32 %v902, %v280
        %v951 = vmul.f32 %v903, %v280
        %v952 = vmul.f32 %v904, %v280
        %v957 = vrot.slane %v950, 7
        %v958 = vsel %vm296, %v957, %v949
        %v959 = vrot.slane %v951, 6
        %v960 = vsel %vm299, %v959, %v958
        %v961 = vrot.slane %v952, 5
        %v962 = vsel %vm302, %v961, %v960
        %963 = vrot.lane.b32.xlu0 %v962, 127
        %v964 = vpop.permute.xlu0 %963
        %v966 = vsel %vm350, %v964, 0.0
        %v972 = vrot.slane %v905, 4
        %v973 = vrot.slane %v906, 3
        %v974 = vsel %vm561, %v973, %v972
        %v975 = vrot.slane %v907, 2
        %v976 = vsel %vm564, %v975, %v974
        %v977 = vrot.slane %v908, 1
        %v978 = vsel %vm567, %v977, %v976
        %v984 = vrot.slane %v910, 7
        %v985 = vsel %vm296, %v984, %v909
        %v986 = vrot.slane %v911, 6
        %v987 = vsel %vm299, %v986, %v985
        %v988 = vrot.slane %v912, 5
        %v989 = vsel %vm302, %v988, %v987
        %v992 = vrot.slane %v926, 4
        %v995 = vrot.slane %v948, 4
        %v997 = vsel %vm373, %v922, %v978
        %v998 = vsel %vm373, %v989, %v992
        %v999 = vsel %vm373, %v930, %v995
        %v1001 = vsel %vm373, %v966, 0
        %1003 = vmatprep.subr.mxu0 0.0
        %1004 = vmatpush1.msra.mxu0 %v997
        %1005 = vmatprep.subr.mxu0 0.0
        %1006 = vmatpush1.msra.mxu0 %v998
        %1007 = vmatprep.subr.mxu0 0.0
        %1008 = vmatpush1.msra.mxu0 %v999
        %1009 = vmatprep.subr.mxu0 0.0
        %1010 = vmatpush1.msra.mxu0 %v1001
        %1011 = vmatprep.subr.mxu0 0.0
        %1012 = vmatpush1.msra.mxu0 0.0
        %1013 = vmatprep.subr.mxu0 0.0
        %1014 = vmatpush1.msra.mxu0 0.0
        %1015 = vmatprep.subr.mxu0 0.0
        %1016 = vmatpush1.msra.mxu0 0.0
        %1017 = vmatprep.subr.mxu0 0.0
        %1018 = vmatpush1.msra.mxu0 0.0
        %1019 = vmatprep.subr.mxu0 0.0
        %1020 = vmatpush1.msra.mxu0 0.0
        %1021 = vmatprep.subr.mxu0 0.0
        %1022 = vmatpush1.msra.mxu0 0.0
        %1023 = vmatprep.subr.mxu0 0.0
        %1024 = vmatpush1.msra.mxu0 0.0
        %1025 = vmatprep.subr.mxu0 0.0
        %1026 = vmatpush1.msra.mxu0 0.0
        %1027 = vmatprep.subr.mxu0 0.0
        %1028 = vmatpush1.msra.mxu0 0.0
        %1029 = vmatprep.subr.mxu0 0.0
        %1030 = vmatpush1.msra.mxu0 0.0
        %1031 = vmatprep.subr.mxu0 0.0
        %1032 = vmatpush1.msra.mxu0 0.0
        %1033 = vmatprep.subr.mxu0 0.0
        %1034 = vmatpush1.msra.mxu0 0.0
        %1035 = vmatprep.subr.mxu0 0.0
        %1036 = vmatpush1.msra.mxu0 0.0
        %1037 = vmatprep.subr.mxu0 0.0
        %1038 = vmatpush1.msra.mxu0 0.0
        %1039 = vmatprep.subr.mxu0 0.0
        %1040 = vmatpush1.msra.mxu0 0.0
        %1041 = vmatprep.subr.mxu0 0.0
        %1042 = vmatpush1.msra.mxu0 0.0
        %1043 = vmatprep.subr.mxu0 0.0
        %1044 = vmatpush1.msra.mxu0 0.0
        %1045 = vmatprep.subr.mxu0 0.0
        %1046 = vmatpush1.msra.mxu0 0.0
        %1047 = vmatprep.subr.mxu0 0.0
        %1048 = vmatpush1.msra.mxu0 0.0
        %1049 = vmatprep.subr.mxu0 0.0
        %1050 = vmatpush1.msra.mxu0 0.0
        %1051 = vmatprep.subr.mxu0 0.0
        %1052 = vmatpush1.msra.mxu0 0.0
        %1053 = vmatprep.subr.mxu0 0.0
        %1054 = vmatpush1.msra.mxu0 0.0
        %1055 = vmatprep.subr.mxu0 0.0
        %1056 = vmatpush1.msra.mxu0 0.0
        %1057 = vmatprep.subr.mxu0 0.0
        %1058 = vmatpush1.msra.mxu0 0.0
        %1059 = vmatprep.subr.mxu0 0.0
        %1060 = vmatpush1.msra.mxu0 0.0
        %1061 = vmatprep.subr.mxu0 0.0
        %1062 = vmatpush1.msra.mxu0 0.0
        %1063 = vmatprep.subr.mxu0 0.0
        %1064 = vmatpush1.msra.mxu0 0.0
        %1065 = vmatprep.subr.mxu0 0.0
        %1066 = vmatpush1.msra.mxu0 0.0
        %1067 = vmatprep.mubr.f32.mxu0 0.0
        %1068 = vmatmul.mubr.f32.gmra.mrb[0].mxu0 %v379
        %v1069 = vpop.f32.mrb[0].mxu0
        %v1070 = vadd.f32 0.0, %v1069
        %v1071 = vpop.f32.mrb[0].mxu0
        %1072 = vdwg.mxu0
        %v1075 = vunpack.c.l.s4 1966171168
        %v1076 = vunpack.c.0.s8 %v1075
        %v1077 = vlaneseq
        %v1078 = vshrl.u32 %v1077, 7
        %v1079 = vsub.s32 %v1076, %v1078
        %v1080 = vrot.slane %v1070, %v1079
        %v1081 = vcombine.high %v1080, %v1080
        %v1083 = vunpack.c.l.s4 1966171168
        %v1084 = vunpack.c.0.s8 %v1083
        %v1085 = vlaneseq
        %v1086 = vshrl.u32 %v1085, 7
        %v1087 = vsub.s32 %v1084, %v1086
        %v1088 = vrot.slane %v1080, %v1087
        %v1090 = vunpack.c.l.s4 1966171168
        %v1091 = vunpack.c.0.s8 %v1090
        %v1092 = vlaneseq
        %v1093 = vshrl.u32 %v1092, 7
        %v1094 = vsub.s32 %v1091, %v1093
        %v1095 = vrot.slane %v1081, %v1094
        %v1096 = vcombine.high %v1088, %v1088
        %v1097 = vcombine.high %v1095, %v1095
        %1102 = vst.msk [vmem:[%s251 + $0x3] sm:$0x1] %vm483, %v1088
        %1103 = vst.msk [vmem:[%s251 + $0xb] sm:$0x1] %vm483, %v1095
        %1104 = vst.msk [vmem:[%s251 + $0x13] sm:$0x1] %vm483, %v1096
        %1105 = vst.msk [vmem:[%s251 + $0x1b] sm:$0x1] %vm483, %v1097
        %v1106 = vld [vmem:[%s224 + $0x4] sm:$0x1]
        %v1107 = vld [vmem:[%s224 + $0xc] sm:$0x1]
        %v1108 = vld [vmem:[%s224 + $0x14] sm:$0x1]
        %v1109 = vld [vmem:[%s224 + $0x1c] sm:$0x1]
        %v1110 = vld [vmem:[%s224 + $0x3] sm:$0x1]
        %v1111 = vld [vmem:[%s224 + $0xb] sm:$0x1]
        %v1112 = vld [vmem:[%s224 + $0x13] sm:$0x1]
        %v1113 = vld [vmem:[%s224 + $0x1b] sm:$0x1]
        %v1114 = vld [vmem:[%s224 + $0x5] sm:$0x1]
        %v1115 = vld [vmem:[%s224 + $0xd] sm:$0x1]
        %v1116 = vld [vmem:[%s224 + $0x15] sm:$0x1]
        %v1117 = vld [vmem:[%s224 + $0x1d] sm:$0x1]
        %v1122 = vrot.slane %v1107, 7
        %v1123 = vsel %vm296, %v1122, %v1106
        %v1124 = vrot.slane %v1108, 6
        %v1125 = vsel %vm299, %v1124, %v1123
        %v1126 = vrot.slane %v1109, 5
        %v1127 = vsel %vm302, %v1126, %v1125
        %1128 = vrot.lane.b32.xlu0 %v1127, 8
        %v1129 = vpop.permute.xlu0 %1128
        %v1131 = vsel %vm307, 0.0, %v1129
        %1132 = vrot.lane.b32.xlu0 %v1127, 120
        %v1133 = vpop.permute.xlu0 %1132
        %v1135 = vsel %vm312, %v1133, 0.0
        %v1136 = vmul.f32 %v1106, %v277
        %v1137 = vmul.f32 %v1107, %v277
        %v1138 = vmul.f32 %v1108, %v277
        %v1139 = vmul.f32 %v1109, %v277
        %v1144 = vrot.slane %v1137, 7
        %v1145 = vsel %vm296, %v1144, %v1136
        %v1146 = vrot.slane %v1138, 6
        %v1147 = vsel %vm299, %v1146, %v1145
        %v1148 = vrot.slane %v1139, 5
        %v1149 = vsel %vm302, %v1148, %v1147
        %1150 = vrot.lane.b32.xlu0 %v1149, 1
        %v1151 = vpop.permute.xlu0 %1150
        %v1153 = vsel %vm331, 0.0, %v1151
        %v1154 = vmul.f32 %v1106, %v280
        %v1155 = vmul.f32 %v1107, %v280
        %v1156 = vmul.f32 %v1108, %v280
        %v1157 = vmul.f32 %v1109, %v280
        %v1162 = vrot.slane %v1155, 7
        %v1163 = vsel %vm296, %v1162, %v1154
        %v1164 = vrot.slane %v1156, 6
        %v1165 = vsel %vm299, %v1164, %v1163
        %v1166 = vrot.slane %v1157, 5
        %v1167 = vsel %vm302, %v1166, %v1165
        %1168 = vrot.lane.b32.xlu0 %v1167, 127
        %v1169 = vpop.permute.xlu0 %1168
        %v1171 = vsel %vm350, %v1169, 0.0
        %v1177 = vrot.slane %v1110, 4
        %v1178 = vrot.slane %v1111, 3
        %v1179 = vsel %vm561, %v1178, %v1177
        %v1180 = vrot.slane %v1112, 2
        %v1181 = vsel %vm564, %v1180, %v1179
        %v1182 = vrot.slane %v1113, 1
        %v1183 = vsel %vm567, %v1182, %v1181
        %v1189 = vrot.slane %v1115, 7
        %v1190 = vsel %vm296, %v1189, %v1114
        %v1191 = vrot.slane %v1116, 6
        %v1192 = vsel %vm299, %v1191, %v1190
        %v1193 = vrot.slane %v1117, 5
        %v1194 = vsel %vm302, %v1193, %v1192
        %v1197 = vrot.slane %v1131, 4
        %v1200 = vrot.slane %v1153, 4
        %v1202 = vsel %vm373, %v1127, %v1183
        %v1203 = vsel %vm373, %v1194, %v1197
        %v1204 = vsel %vm373, %v1135, %v1200
        %v1206 = vsel %vm373, %v1171, 0
        %1208 = vmatprep.subr.mxu0 0.0
        %1209 = vmatpush1.msra.mxu0 %v1202
        %1210 = vmatprep.subr.mxu0 0.0
        %1211 = vmatpush1.msra.mxu0 %v1203
        %1212 = vmatprep.subr.mxu0 0.0
        %1213 = vmatpush1.msra.mxu0 %v1204
        %1214 = vmatprep.subr.mxu0 0.0
        %1215 = vmatpush1.msra.mxu0 %v1206
        %1216 = vmatprep.subr.mxu0 0.0
        %1217 = vmatpush1.msra.mxu0 0.0
        %1218 = vmatprep.subr.mxu0 0.0
        %1219 = vmatpush1.msra.mxu0 0.0
        %1220 = vmatprep.subr.mxu0 0.0
        %1221 = vmatpush1.msra.mxu0 0.0
        %1222 = vmatprep.subr.mxu0 0.0
        %1223 = vmatpush1.msra.mxu0 0.0
        %1224 = vmatprep.subr.mxu0 0.0
        %1225 = vmatpush1.msra.mxu0 0.0
        %1226 = vmatprep.subr.mxu0 0.0
        %1227 = vmatpush1.msra.mxu0 0.0
        %1228 = vmatprep.subr.mxu0 0.0
        %1229 = vmatpush1.msra.mxu0 0.0
        %1230 = vmatprep.subr.mxu0 0.0
        %1231 = vmatpush1.msra.mxu0 0.0
        %1232 = vmatprep.subr.mxu0 0.0
        %1233 = vmatpush1.msra.mxu0 0.0
        %1234 = vmatprep.subr.mxu0 0.0
        %1235 = vmatpush1.msra.mxu0 0.0
        %1236 = vmatprep.subr.mxu0 0.0
        %1237 = vmatpush1.msra.mxu0 0.0
        %1238 = vmatprep.subr.mxu0 0.0
        %1239 = vmatpush1.msra.mxu0 0.0
        %1240 = vmatprep.subr.mxu0 0.0
        %1241 = vmatpush1.msra.mxu0 0.0
        %1242 = vmatprep.subr.mxu0 0.0
        %1243 = vmatpush1.msra.mxu0 0.0
        %1244 = vmatprep.subr.mxu0 0.0
        %1245 = vmatpush1.msra.mxu0 0.0
        %1246 = vmatprep.subr.mxu0 0.0
        %1247 = vmatpush1.msra.mxu0 0.0
        %1248 = vmatprep.subr.mxu0 0.0
        %1249 = vmatpush1.msra.mxu0 0.0
        %1250 = vmatprep.subr.mxu0 0.0
        %1251 = vmatpush1.msra.mxu0 0.0
        %1252 = vmatprep.subr.mxu0 0.0
        %1253 = vmatpush1.msra.mxu0 0.0
        %1254 = vmatprep.subr.mxu0 0.0
        %1255 = vmatpush1.msra.mxu0 0.0
        %1256 = vmatprep.subr.mxu0 0.0
        %1257 = vmatpush1.msra.mxu0 0.0
        %1258 = vmatprep.subr.mxu0 0.0
        %1259 = vmatpush1.msra.mxu0 0.0
        %1260 = vmatprep.subr.mxu0 0.0
        %1261 = vmatpush1.msra.mxu0 0.0
        %1262 = vmatprep.subr.mxu0 0.0
        %1263 = vmatpush1.msra.mxu0 0.0
        %1264 = vmatprep.subr.mxu0 0.0
        %1265 = vmatpush1.msra.mxu0 0.0
        %1266 = vmatprep.subr.mxu0 0.0
        %1267 = vmatpush1.msra.mxu0 0.0
        %1268 = vmatprep.subr.mxu0 0.0
        %1269 = vmatpush1.msra.mxu0 0.0
        %1270 = vmatprep.subr.mxu0 0.0
        %1271 = vmatpush1.msra.mxu0 0.0
        %1272 = vmatprep.mubr.f32.mxu0 0.0
        %1273 = vmatmul.mubr.f32.gmra.mrb[0].mxu0 %v379
        %v1274 = vpop.f32.mrb[0].mxu0
        %v1275 = vadd.f32 0.0, %v1274
        %v1276 = vpop.f32.mrb[0].mxu0
        %1277 = vdwg.mxu0
        %v1280 = vunpack.c.l.s4 1966171168
        %v1281 = vunpack.c.0.s8 %v1280
        %v1282 = vlaneseq
        %v1283 = vshrl.u32 %v1282, 7
        %v1284 = vsub.s32 %v1281, %v1283
        %v1285 = vrot.slane %v1275, %v1284
        %v1286 = vcombine.high %v1285, %v1285
        %v1288 = vunpack.c.l.s4 1966171168
        %v1289 = vunpack.c.0.s8 %v1288
        %v1290 = vlaneseq
        %v1291 = vshrl.u32 %v1290, 7
        %v1292 = vsub.s32 %v1289, %v1291
        %v1293 = vrot.slane %v1285, %v1292
        %v1295 = vunpack.c.l.s4 1966171168
        %v1296 = vunpack.c.0.s8 %v1295
        %v1297 = vlaneseq
        %v1298 = vshrl.u32 %v1297, 7
        %v1299 = vsub.s32 %v1296, %v1298
        %v1300 = vrot.slane %v1286, %v1299
        %v1301 = vcombine.high %v1293, %v1293
        %v1302 = vcombine.high %v1300, %v1300
        %1307 = vst.msk [vmem:[%s251 + $0x4] sm:$0x1] %vm483, %v1293
        %1308 = vst.msk [vmem:[%s251 + $0xc] sm:$0x1] %vm483, %v1300
        %1309 = vst.msk [vmem:[%s251 + $0x14] sm:$0x1] %vm483, %v1301
        %1310 = vst.msk [vmem:[%s251 + $0x1c] sm:$0x1] %vm483, %v1302
        %v1311 = vld [vmem:[%s224 + $0x5] sm:$0x1]
        %v1312 = vld [vmem:[%s224 + $0xd] sm:$0x1]
        %v1313 = vld [vmem:[%s224 + $0x15] sm:$0x1]
        %v1314 = vld [vmem:[%s224 + $0x1d] sm:$0x1]
        %v1315 = vld [vmem:[%s224 + $0x4] sm:$0x1]
        %v1316 = vld [vmem:[%s224 + $0xc] sm:$0x1]
        %v1317 = vld [vmem:[%s224 + $0x14] sm:$0x1]
        %v1318 = vld [vmem:[%s224 + $0x1c] sm:$0x1]
        %v1319 = vld [vmem:[%s224 + $0x6] sm:$0x1]
        %v1320 = vld [vmem:[%s224 + $0xe] sm:$0x1]
        %v1321 = vld [vmem:[%s224 + $0x16] sm:$0x1]
        %v1322 = vld [vmem:[%s224 + $0x1e] sm:$0x1]
        %v1327 = vrot.slane %v1312, 7
        %v1328 = vsel %vm296, %v1327, %v1311
        %v1329 = vrot.slane %v1313, 6
        %v1330 = vsel %vm299, %v1329, %v1328
        %v1331 = vrot.slane %v1314, 5
        %v1332 = vsel %vm302, %v1331, %v1330
        %1333 = vrot.lane.b32.xlu0 %v1332, 8
        %v1334 = vpop.permute.xlu0 %1333
        %v1336 = vsel %vm307, 0.0, %v1334
        %1337 = vrot.lane.b32.xlu0 %v1332, 120
        %v1338 = vpop.permute.xlu0 %1337
        %v1340 = vsel %vm312, %v1338, 0.0
        %v1341 = vmul.f32 %v1311, %v277
        %v1342 = vmul.f32 %v1312, %v277
        %v1343 = vmul.f32 %v1313, %v277
        %v1344 = vmul.f32 %v1314, %v277
        %v1349 = vrot.slane %v1342, 7
        %v1350 = vsel %vm296, %v1349, %v1341
        %v1351 = vrot.slane %v1343, 6
        %v1352 = vsel %vm299, %v1351, %v1350
        %v1353 = vrot.slane %v1344, 5
        %v1354 = vsel %vm302, %v1353, %v1352
        %1355 = vrot.lane.b32.xlu0 %v1354, 1
        %v1356 = vpop.permute.xlu0 %1355
        %v1358 = vsel %vm331, 0.0, %v1356
        %v1359 = vmul.f32 %v1311, %v280
        %v1360 = vmul.f32 %v1312, %v280
        %v1361 = vmul.f32 %v1313, %v280
        %v1362 = vmul.f32 %v1314, %v280
        %v1367 = vrot.slane %v1360, 7
        %v1368 = vsel %vm296, %v1367, %v1359
        %v1369 = vrot.slane %v1361, 6
        %v1370 = vsel %vm299, %v1369, %v1368
        %v1371 = vrot.slane %v1362, 5
        %v1372 = vsel %vm302, %v1371, %v1370
        %1373 = vrot.lane.b32.xlu0 %v1372, 127
        %v1374 = vpop.permute.xlu0 %1373
        %v1376 = vsel %vm350, %v1374, 0.0
        %v1382 = vrot.slane %v1315, 4
        %v1383 = vrot.slane %v1316, 3
        %v1384 = vsel %vm561, %v1383, %v1382
        %v1385 = vrot.slane %v1317, 2
        %v1386 = vsel %vm564, %v1385, %v1384
        %v1387 = vrot.slane %v1318, 1
        %v1388 = vsel %vm567, %v1387, %v1386
        %v1394 = vrot.slane %v1320, 7
        %v1395 = vsel %vm296, %v1394, %v1319
        %v1396 = vrot.slane %v1321, 6
        %v1397 = vsel %vm299, %v1396, %v1395
        %v1398 = vrot.slane %v1322, 5
        %v1399 = vsel %vm302, %v1398, %v1397
        %v1402 = vrot.slane %v1336, 4
        %v1405 = vrot.slane %v1358, 4
        %v1407 = vsel %vm373, %v1332, %v1388
        %v1408 = vsel %vm373, %v1399, %v1402
        %v1409 = vsel %vm373, %v1340, %v1405
        %v1411 = vsel %vm373, %v1376, 0
        %1413 = vmatprep.subr.mxu0 0.0
        %1414 = vmatpush1.msra.mxu0 %v1407
        %1415 = vmatprep.subr.mxu0 0.0
        %1416 = vmatpush1.msra.mxu0 %v1408
        %1417 = vmatprep.subr.mxu0 0.0
        %1418 = vmatpush1.msra.mxu0 %v1409
        %1419 = vmatprep.subr.mxu0 0.0
        %1420 = vmatpush1.msra.mxu0 %v1411
        %1421 = vmatprep.subr.mxu0 0.0
        %1422 = vmatpush1.msra.mxu0 0.0
        %1423 = vmatprep.subr.mxu0 0.0
        %1424 = vmatpush1.msra.mxu0 0.0
        %1425 = vmatprep.subr.mxu0 0.0
        %1426 = vmatpush1.msra.mxu0 0.0
        %1427 = vmatprep.subr.mxu0 0.0
        %1428 = vmatpush1.msra.mxu0 0.0
        %1429 = vmatprep.subr.mxu0 0.0
        %1430 = vmatpush1.msra.mxu0 0.0
        %1431 = vmatprep.subr.mxu0 0.0
        %1432 = vmatpush1.msra.mxu0 0.0
        %1433 = vmatprep.subr.mxu0 0.0
        %1434 = vmatpush1.msra.mxu0 0.0
        %1435 = vmatprep.subr.mxu0 0.0
        %1436 = vmatpush1.msra.mxu0 0.0
        %1437 = vmatprep.subr.mxu0 0.0
        %1438 = vmatpush1.msra.mxu0 0.0
        %1439 = vmatprep.subr.mxu0 0.0
        %1440 = vmatpush1.msra.mxu0 0.0
        %1441 = vmatprep.subr.mxu0 0.0
        %1442 = vmatpush1.msra.mxu0 0.0
        %1443 = vmatprep.subr.mxu0 0.0
        %1444 = vmatpush1.msra.mxu0 0.0
        %1445 = vmatprep.subr.mxu0 0.0
        %1446 = vmatpush1.msra.mxu0 0.0
        %1447 = vmatprep.subr.mxu0 0.0
        %1448 = vmatpush1.msra.mxu0 0.0
        %1449 = vmatprep.subr.mxu0 0.0
        %1450 = vmatpush1.msra.mxu0 0.0
        %1451 = vmatprep.subr.mxu0 0.0
        %1452 = vmatpush1.msra.mxu0 0.0
        %1453 = vmatprep.subr.mxu0 0.0
        %1454 = vmatpush1.msra.mxu0 0.0
        %1455 = vmatprep.subr.mxu0 0.0
        %1456 = vmatpush1.msra.mxu0 0.0
        %1457 = vmatprep.subr.mxu0 0.0
        %1458 = vmatpush1.msra.mxu0 0.0
        %1459 = vmatprep.subr.mxu0 0.0
        %1460 = vmatpush1.msra.mxu0 0.0
        %1461 = vmatprep.subr.mxu0 0.0
        %1462 = vmatpush1.msra.mxu0 0.0
        %1463 = vmatprep.subr.mxu0 0.0
        %1464 = vmatpush1.msra.mxu0 0.0
        %1465 = vmatprep.subr.mxu0 0.0
        %1466 = vmatpush1.msra.mxu0 0.0
        %1467 = vmatprep.subr.mxu0 0.0
        %1468 = vmatpush1.msra.mxu0 0.0
        %1469 = vmatprep.subr.mxu0 0.0
        %1470 = vmatpush1.msra.mxu0 0.0
        %1471 = vmatprep.subr.mxu0 0.0
        %1472 = vmatpush1.msra.mxu0 0.0
        %1473 = vmatprep.subr.mxu0 0.0
        %1474 = vmatpush1.msra.mxu0 0.0
        %1475 = vmatprep.subr.mxu0 0.0
        %1476 = vmatpush1.msra.mxu0 0.0
        %1477 = vmatprep.mubr.f32.mxu0 0.0
        %1478 = vmatmul.mubr.f32.gmra.mrb[0].mxu0 %v379
        %v1479 = vpop.f32.mrb[0].mxu0
        %v1480 = vadd.f32 0.0, %v1479
        %v1481 = vpop.f32.mrb[0].mxu0
        %1482 = vdwg.mxu0
        %v1485 = vunpack.c.l.s4 1966171168
        %v1486 = vunpack.c.0.s8 %v1485
        %v1487 = vlaneseq
        %v1488 = vshrl.u32 %v1487, 7
        %v1489 = vsub.s32 %v1486, %v1488
        %v1490 = vrot.slane %v1480, %v1489
        %v1491 = vcombine.high %v1490, %v1490
        %v1493 = vunpack.c.l.s4 1966171168
        %v1494 = vunpack.c.0.s8 %v1493
        %v1495 = vlaneseq
        %v1496 = vshrl.u32 %v1495, 7
        %v1497 = vsub.s32 %v1494, %v1496
        %v1498 = vrot.slane %v1490, %v1497
        %v1500 = vunpack.c.l.s4 1966171168
        %v1501 = vunpack.c.0.s8 %v1500
        %v1502 = vlaneseq
        %v1503 = vshrl.u32 %v1502, 7
        %v1504 = vsub.s32 %v1501, %v1503
        %v1505 = vrot.slane %v1491, %v1504
        %v1506 = vcombine.high %v1498, %v1498
        %v1507 = vcombine.high %v1505, %v1505
        %1512 = vst.msk [vmem:[%s251 + $0x5] sm:$0x1] %vm483, %v1498
        %1513 = vst.msk [vmem:[%s251 + $0xd] sm:$0x1] %vm483, %v1505
        %1514 = vst.msk [vmem:[%s251 + $0x15] sm:$0x1] %vm483, %v1506
        %1515 = vst.msk [vmem:[%s251 + $0x1d] sm:$0x1] %vm483, %v1507
        %v1516 = vld [vmem:[%s224 + $0x6] sm:$0x1]
        %v1517 = vld [vmem:[%s224 + $0xe] sm:$0x1]
        %v1518 = vld [vmem:[%s224 + $0x16] sm:$0x1]
        %v1519 = vld [vmem:[%s224 + $0x1e] sm:$0x1]
        %v1520 = vld [vmem:[%s224 + $0x5] sm:$0x1]
        %v1521 = vld [vmem:[%s224 + $0xd] sm:$0x1]
        %v1522 = vld [vmem:[%s224 + $0x15] sm:$0x1]
        %v1523 = vld [vmem:[%s224 + $0x1d] sm:$0x1]
        %v1524 = vld [vmem:[%s224 + $0x7] sm:$0x1]
        %v1525 = vld [vmem:[%s224 + $0xf] sm:$0x1]
        %v1526 = vld [vmem:[%s224 + $0x17] sm:$0x1]
        %v1527 = vld [vmem:[%s224 + $0x1f] sm:$0x1]
        %v1532 = vrot.slane %v1517, 7
        %v1533 = vsel %vm296, %v1532, %v1516
        %v1534 = vrot.slane %v1518, 6
        %v1535 = vsel %vm299, %v1534, %v1533
        %v1536 = vrot.slane %v1519, 5
        %v1537 = vsel %vm302, %v1536, %v1535
        %1538 = vrot.lane.b32.xlu0 %v1537, 8
        %v1539 = vpop.permute.xlu0 %1538
        %v1541 = vsel %vm307, 0.0, %v1539
        %1542 = vrot.lane.b32.xlu0 %v1537, 120
        %v1543 = vpop.permute.xlu0 %1542
        %v1545 = vsel %vm312, %v1543, 0.0
        %v1546 = vmul.f32 %v1516, %v277
        %v1547 = vmul.f32 %v1517, %v277
        %v1548 = vmul.f32 %v1518, %v277
        %v1549 = vmul.f32 %v1519, %v277
        %v1554 = vrot.slane %v1547, 7
        %v1555 = vsel %vm296, %v1554, %v1546
        %v1556 = vrot.slane %v1548, 6
        %v1557 = vsel %vm299, %v1556, %v1555
        %v1558 = vrot.slane %v1549, 5
        %v1559 = vsel %vm302, %v1558, %v1557
        %1560 = vrot.lane.b32.xlu0 %v1559, 1
        %v1561 = vpop.permute.xlu0 %1560
        %v1563 = vsel %vm331, 0.0, %v1561
        %v1564 = vmul.f32 %v1516, %v280
        %v1565 = vmul.f32 %v1517, %v280
        %v1566 = vmul.f32 %v1518, %v280
        %v1567 = vmul.f32 %v1519, %v280
        %v1572 = vrot.slane %v1565, 7
        %v1573 = vsel %vm296, %v1572, %v1564
        %v1574 = vrot.slane %v1566, 6
        %v1575 = vsel %vm299, %v1574, %v1573
        %v1576 = vrot.slane %v1567, 5
        %v1577 = vsel %vm302, %v1576, %v1575
        %1578 = vrot.lane.b32.xlu0 %v1577, 127
        %v1579 = vpop.permute.xlu0 %1578
        %v1581 = vsel %vm350, %v1579, 0.0
        %v1587 = vrot.slane %v1520, 4
        %v1588 = vrot.slane %v1521, 3
        %v1589 = vsel %vm561, %v1588, %v1587
        %v1590 = vrot.slane %v1522, 2
        %v1591 = vsel %vm564, %v1590, %v1589
        %v1592 = vrot.slane %v1523, 1
        %v1593 = vsel %vm567, %v1592, %v1591
        %v1599 = vrot.slane %v1525, 7
        %v1600 = vsel %vm296, %v1599, %v1524
        %v1601 = vrot.slane %v1526, 6
        %v1602 = vsel %vm299, %v1601, %v1600
        %v1603 = vrot.slane %v1527, 5
        %v1604 = vsel %vm302, %v1603, %v1602
        %v1607 = vrot.slane %v1541, 4
        %v1610 = vrot.slane %v1563, 4
        %v1612 = vsel %vm373, %v1537, %v1593
        %v1613 = vsel %vm373, %v1604, %v1607
        %v1614 = vsel %vm373, %v1545, %v1610
        %v1616 = vsel %vm373, %v1581, 0
        %1618 = vmatprep.subr.mxu0 0.0
        %1619 = vmatpush1.msra.mxu0 %v1612
        %1620 = vmatprep.subr.mxu0 0.0
        %1621 = vmatpush1.msra.mxu0 %v1613
        %1622 = vmatprep.subr.mxu0 0.0
        %1623 = vmatpush1.msra.mxu0 %v1614
        %1624 = vmatprep.subr.mxu0 0.0
        %1625 = vmatpush1.msra.mxu0 %v1616
        %1626 = vmatprep.subr.mxu0 0.0
        %1627 = vmatpush1.msra.mxu0 0.0
        %1628 = vmatprep.subr.mxu0 0.0
        %1629 = vmatpush1.msra.mxu0 0.0
        %1630 = vmatprep.subr.mxu0 0.0
        %1631 = vmatpush1.msra.mxu0 0.0
        %1632 = vmatprep.subr.mxu0 0.0
        %1633 = vmatpush1.msra.mxu0 0.0
        %1634 = vmatprep.subr.mxu0 0.0
        %1635 = vmatpush1.msra.mxu0 0.0
        %1636 = vmatprep.subr.mxu0 0.0
        %1637 = vmatpush1.msra.mxu0 0.0
        %1638 = vmatprep.subr.mxu0 0.0
        %1639 = vmatpush1.msra.mxu0 0.0
        %1640 = vmatprep.subr.mxu0 0.0
        %1641 = vmatpush1.msra.mxu0 0.0
        %1642 = vmatprep.subr.mxu0 0.0
        %1643 = vmatpush1.msra.mxu0 0.0
        %1644 = vmatprep.subr.mxu0 0.0
        %1645 = vmatpush1.msra.mxu0 0.0
        %1646 = vmatprep.subr.mxu0 0.0
        %1647 = vmatpush1.msra.mxu0 0.0
        %1648 = vmatprep.subr.mxu0 0.0
        %1649 = vmatpush1.msra.mxu0 0.0
        %1650 = vmatprep.subr.mxu0 0.0
        %1651 = vmatpush1.msra.mxu0 0.0
        %1652 = vmatprep.subr.mxu0 0.0
        %1653 = vmatpush1.msra.mxu0 0.0
        %1654 = vmatprep.subr.mxu0 0.0
        %1655 = vmatpush1.msra.mxu0 0.0
        %1656 = vmatprep.subr.mxu0 0.0
        %1657 = vmatpush1.msra.mxu0 0.0
        %1658 = vmatprep.subr.mxu0 0.0
        %1659 = vmatpush1.msra.mxu0 0.0
        %1660 = vmatprep.subr.mxu0 0.0
        %1661 = vmatpush1.msra.mxu0 0.0
        %1662 = vmatprep.subr.mxu0 0.0
        %1663 = vmatpush1.msra.mxu0 0.0
        %1664 = vmatprep.subr.mxu0 0.0
        %1665 = vmatpush1.msra.mxu0 0.0
        %1666 = vmatprep.subr.mxu0 0.0
        %1667 = vmatpush1.msra.mxu0 0.0
        %1668 = vmatprep.subr.mxu0 0.0
        %1669 = vmatpush1.msra.mxu0 0.0
        %1670 = vmatprep.subr.mxu0 0.0
        %1671 = vmatpush1.msra.mxu0 0.0
        %1672 = vmatprep.subr.mxu0 0.0
        %1673 = vmatpush1.msra.mxu0 0.0
        %1674 = vmatprep.subr.mxu0 0.0
        %1675 = vmatpush1.msra.mxu0 0.0
        %1676 = vmatprep.subr.mxu0 0.0
        %1677 = vmatpush1.msra.mxu0 0.0
        %1678 = vmatprep.subr.mxu0 0.0
        %1679 = vmatpush1.msra.mxu0 0.0
        %1680 = vmatprep.subr.mxu0 0.0
        %1681 = vmatpush1.msra.mxu0 0.0
        %1682 = vmatprep.mubr.f32.mxu0 0.0
        %1683 = vmatmul.mubr.f32.gmra.mrb[0].mxu0 %v379
        %v1684 = vpop.f32.mrb[0].mxu0
        %v1685 = vadd.f32 0.0, %v1684
        %v1686 = vpop.f32.mrb[0].mxu0
        %1687 = vdwg.mxu0
        %v1690 = vunpack.c.l.s4 1966171168
        %v1691 = vunpack.c.0.s8 %v1690
        %v1692 = vlaneseq
        %v1693 = vshrl.u32 %v1692, 7
        %v1694 = vsub.s32 %v1691, %v1693
        %v1695 = vrot.slane %v1685, %v1694
        %v1696 = vcombine.high %v1695, %v1695
        %v1698 = vunpack.c.l.s4 1966171168
        %v1699 = vunpack.c.0.s8 %v1698
        %v1700 = vlaneseq
        %v1701 = vshrl.u32 %v1700, 7
        %v1702 = vsub.s32 %v1699, %v1701
        %v1703 = vrot.slane %v1695, %v1702
        %v1705 = vunpack.c.l.s4 1966171168
        %v1706 = vunpack.c.0.s8 %v1705
        %v1707 = vlaneseq
        %v1708 = vshrl.u32 %v1707, 7
        %v1709 = vsub.s32 %v1706, %v1708
        %v1710 = vrot.slane %v1696, %v1709
        %v1711 = vcombine.high %v1703, %v1703
        %v1712 = vcombine.high %v1710, %v1710
        %1717 = vst.msk [vmem:[%s251 + $0x6] sm:$0x1] %vm483, %v1703
        %1718 = vst.msk [vmem:[%s251 + $0xe] sm:$0x1] %vm483, %v1710
        %1719 = vst.msk [vmem:[%s251 + $0x16] sm:$0x1] %vm483, %v1711
        %1720 = vst.msk [vmem:[%s251 + $0x1e] sm:$0x1] %vm483, %v1712
        %v1721 = vld [vmem:[%s224 + $0x7] sm:$0x1]
        %v1722 = vld [vmem:[%s224 + $0xf] sm:$0x1]
        %v1723 = vld [vmem:[%s224 + $0x17] sm:$0x1]
        %v1724 = vld [vmem:[%s224 + $0x1f] sm:$0x1]
        %v1725 = vld [vmem:[%s224 + $0x6] sm:$0x1]
        %v1726 = vld [vmem:[%s224 + $0xe] sm:$0x1]
        %v1727 = vld [vmem:[%s224 + $0x16] sm:$0x1]
        %v1728 = vld [vmem:[%s224 + $0x1e] sm:$0x1]
        %v1733 = vrot.slane %v1722, 7
        %v1734 = vsel %vm296, %v1733, %v1721
        %v1735 = vrot.slane %v1723, 6
        %v1736 = vsel %vm299, %v1735, %v1734
        %v1737 = vrot.slane %v1724, 5
        %v1738 = vsel %vm302, %v1737, %v1736
        %1739 = vrot.lane.b32.xlu0 %v1738, 8
        %v1740 = vpop.permute.xlu0 %1739
        %v1742 = vsel %vm307, 0.0, %v1740
        %1743 = vrot.lane.b32.xlu0 %v1738, 120
        %v1744 = vpop.permute.xlu0 %1743
        %v1746 = vsel %vm312, %v1744, 0.0
        %v1747 = vmul.f32 %v1721, %v277
        %v1748 = vmul.f32 %v1722, %v277
        %v1749 = vmul.f32 %v1723, %v277
        %v1750 = vmul.f32 %v1724, %v277
        %v1755 = vrot.slane %v1748, 7
        %v1756 = vsel %vm296, %v1755, %v1747
        %v1757 = vrot.slane %v1749, 6
        %v1758 = vsel %vm299, %v1757, %v1756
        %v1759 = vrot.slane %v1750, 5
        %v1760 = vsel %vm302, %v1759, %v1758
        %1761 = vrot.lane.b32.xlu0 %v1760, 1
        %v1762 = vpop.permute.xlu0 %1761
        %v1764 = vsel %vm331, 0.0, %v1762
        %v1765 = vmul.f32 %v1721, %v280
        %v1766 = vmul.f32 %v1722, %v280
        %v1767 = vmul.f32 %v1723, %v280
        %v1768 = vmul.f32 %v1724, %v280
        %v1773 = vrot.slane %v1766, 7
        %v1774 = vsel %vm296, %v1773, %v1765
        %v1775 = vrot.slane %v1767, 6
        %v1776 = vsel %vm299, %v1775, %v1774
        %v1777 = vrot.slane %v1768, 5
        %v1778 = vsel %vm302, %v1777, %v1776
        %1779 = vrot.lane.b32.xlu0 %v1778, 127
        %v1780 = vpop.permute.xlu0 %1779
        %v1782 = vsel %vm350, %v1780, 0.0
        %v1788 = vrot.slane %v1725, 4
        %v1789 = vrot.slane %v1726, 3
        %v1790 = vsel %vm561, %v1789, %v1788
        %v1791 = vrot.slane %v1727, 2
        %v1792 = vsel %vm564, %v1791, %v1790
        %v1793 = vrot.slane %v1728, 1
        %v1794 = vsel %vm567, %v1793, %v1792
        %v1797 = vrot.slane %v1742, 4
        %v1800 = vrot.slane %v1764, 4
        %v1802 = vsel %vm373, %v1738, %v1794
        %v1803 = vsel %vm373, %v282, %v1797
        %v1804 = vsel %vm373, %v1746, %v1800
        %v1806 = vsel %vm373, %v1782, 0
        %1808 = vmatprep.subr.mxu0 0.0
        %1809 = vmatpush1.msra.mxu0 %v1802
        %1810 = vmatprep.subr.mxu0 0.0
        %1811 = vmatpush1.msra.mxu0 %v1803
        %1812 = vmatprep.subr.mxu0 0.0
        %1813 = vmatpush1.msra.mxu0 %v1804
        %1814 = vmatprep.subr.mxu0 0.0
        %1815 = vmatpush1.msra.mxu0 %v1806
        %1816 = vmatprep.subr.mxu0 0.0
        %1817 = vmatpush1.msra.mxu0 0.0
        %1818 = vmatprep.subr.mxu0 0.0
        %1819 = vmatpush1.msra.mxu0 0.0
        %1820 = vmatprep.subr.mxu0 0.0
        %1821 = vmatpush1.msra.mxu0 0.0
        %1822 = vmatprep.subr.mxu0 0.0
        %1823 = vmatpush1.msra.mxu0 0.0
        %1824 = vmatprep.subr.mxu0 0.0
        %1825 = vmatpush1.msra.mxu0 0.0
        %1826 = vmatprep.subr.mxu0 0.0
        %1827 = vmatpush1.msra.mxu0 0.0
        %1828 = vmatprep.subr.mxu0 0.0
        %1829 = vmatpush1.msra.mxu0 0.0
        %1830 = vmatprep.subr.mxu0 0.0
        %1831 = vmatpush1.msra.mxu0 0.0
        %1832 = vmatprep.subr.mxu0 0.0
        %1833 = vmatpush1.msra.mxu0 0.0
        %1834 = vmatprep.subr.mxu0 0.0
        %1835 = vmatpush1.msra.mxu0 0.0
        %1836 = vmatprep.subr.mxu0 0.0
        %1837 = vmatpush1.msra.mxu0 0.0
        %1838 = vmatprep.subr.mxu0 0.0
        %1839 = vmatpush1.msra.mxu0 0.0
        %1840 = vmatprep.subr.mxu0 0.0
        %1841 = vmatpush1.msra.mxu0 0.0
        %1842 = vmatprep.subr.mxu0 0.0
        %1843 = vmatpush1.msra.mxu0 0.0
        %1844 = vmatprep.subr.mxu0 0.0
        %1845 = vmatpush1.msra.mxu0 0.0
        %1846 = vmatprep.subr.mxu0 0.0
        %1847 = vmatpush1.msra.mxu0 0.0
        %1848 = vmatprep.subr.mxu0 0.0
        %1849 = vmatpush1.msra.mxu0 0.0
        %1850 = vmatprep.subr.mxu0 0.0
        %1851 = vmatpush1.msra.mxu0 0.0
        %1852 = vmatprep.subr.mxu0 0.0
        %1853 = vmatpush1.msra.mxu0 0.0
        %1854 = vmatprep.subr.mxu0 0.0
        %1855 = vmatpush1.msra.mxu0 0.0
        %1856 = vmatprep.subr.mxu0 0.0
        %1857 = vmatpush1.msra.mxu0 0.0
        %1858 = vmatprep.subr.mxu0 0.0
        %1859 = vmatpush1.msra.mxu0 0.0
        %1860 = vmatprep.subr.mxu0 0.0
        %1861 = vmatpush1.msra.mxu0 0.0
        %1862 = vmatprep.subr.mxu0 0.0
        %1863 = vmatpush1.msra.mxu0 0.0
        %1864 = vmatprep.subr.mxu0 0.0
        %1865 = vmatpush1.msra.mxu0 0.0
        %1866 = vmatprep.subr.mxu0 0.0
        %1867 = vmatpush1.msra.mxu0 0.0
        %1868 = vmatprep.subr.mxu0 0.0
        %1869 = vmatpush1.msra.mxu0 0.0
        %1870 = vmatprep.subr.mxu0 0.0
        %1871 = vmatpush1.msra.mxu0 0.0
        %1872 = vmatprep.mubr.f32.mxu0 0.0
        %1873 = vmatmul.mubr.f32.gmra.mrb[0].mxu0 %v379
        %v1874 = vpop.f32.mrb[0].mxu0
        %v1875 = vadd.f32 0.0, %v1874
        %v1876 = vpop.f32.mrb[0].mxu0
        %1877 = vdwg.mxu0
        %v1880 = vunpack.c.l.s4 1966171168
        %v1881 = vunpack.c.0.s8 %v1880
        %v1882 = vlaneseq
        %v1883 = vshrl.u32 %v1882, 7
        %v1884 = vsub.s32 %v1881, %v1883
        %v1885 = vrot.slane %v1875, %v1884
        %v1886 = vcombine.high %v1885, %v1885
        %v1888 = vunpack.c.l.s4 1966171168
        %v1889 = vunpack.c.0.s8 %v1888
        %v1890 = vlaneseq
        %v1891 = vshrl.u32 %v1890, 7
        %v1892 = vsub.s32 %v1889, %v1891
        %v1893 = vrot.slane %v1885, %v1892
        %v1895 = vunpack.c.l.s4 1966171168
        %v1896 = vunpack.c.0.s8 %v1895
        %v1897 = vlaneseq
        %v1898 = vshrl.u32 %v1897, 7
        %v1899 = vsub.s32 %v1896, %v1898
        %v1900 = vrot.slane %v1886, %v1899
        %v1901 = vcombine.high %v1893, %v1893
        %v1902 = vcombine.high %v1900, %v1900
        %1907 = vst.msk [vmem:[%s251 + $0x7] sm:$0x1] %vm483, %v1893
        %1908 = vst.msk [vmem:[%s251 + $0xf] sm:$0x1] %vm483, %v1900
        %1909 = vst.msk [vmem:[%s251 + $0x17] sm:$0x1] %vm483, %v1901
        %1910 = vst.msk [vmem:[%s251 + $0x1f] sm:$0x1] %vm483, %v1902
        %s1911 = sand.u32 %s113, 1
        %s1912 = sand.u32 %s113, 1
        %s1913 = smul.addr %s1912, 32
        %s1914 = scalar_lea.vmem [#allocation3], %s1913
        // Predicated region
        $region71: #{reconv_pallas.1} parent=65 // pred_check
          %p1915 = pneg %p123
        $region72: #{reconv_pallas.1} parent=65 // pred_check_branch
          %1917 = sbr.rel (%p1915) target = $region74
        $region73: #{reconv_pallas.1} parent=65 // pred_region
          %s1918 = smul.addr %s18, 8
          %s1919 = sadd.s32 %s19, %s1918
          %s1920 = smul.addr %s1919, 8
          %s1921 = scalar_lea.vmem %s3, %s1920
          // Predicated region
          $region75: #{reconv_pallas.1} parent=73 // pred_check
            _
          $region76: #{reconv_pallas.1} parent=73 // pred_check_branch
            %1923 = sbr.rel (0) target = $region78
          $region77: #{reconv_pallas.1} parent=73 // pred_region
            // Predicated region
            $region79: #{reconv_pallas.1} parent=77 // pred_check
              _
            $region80: #{reconv_pallas.1} parent=77 // pred_check_branch
              %1925 = sbr.rel (0) target = $region82
            $region81: #{reconv_pallas.1} parent=77 // pred_region
              // Predicated region
              $region94: #{reconv_pallas.1} parent=81 // pred_check
                _
              $region95: #{reconv_pallas.1} parent=81 // pred_check_branch
                %1946 = sbr.rel (0) target = $region97
              $region96: #{reconv_pallas.1} parent=81 // pred_region
                loop: start=0, step=1, limit=1
                $region98: #{reconv_pallas.1} parent=96 // loop_pre_header
                  _
                $region99: #{reconv_pallas.1} parent=96 // loop_header
                  %s1948 = sphi 0, %s1952
                  %p1949 = scmp.ge.s32.totalorder %s1948, 1
                  %s1953 = sphi %s1914, %s1914
                  %s1954 = sphi %s1921, %s1921
                $region100: #{reconv_pallas.1} parent=96 // loop_header_branch
                  %1951 = sbr.rel (%p1949) target = $region104
                $region101: #{reconv_pallas.1} parent=96 // loop_body
                  %v1955 = vld [vmem:[%s1953] sm:$0xff]
                  %1956 = vst [vmem:[%s1954] sm:$0xff] %v1955
                  %v1957 = vld [vmem:[%s1953 + $0x8] sm:$0xff]
                  %1958 = vst [vmem:[%s1954 + $0x10] sm:$0xff] %v1957
                  %v1959 = vld [vmem:[%s1953 + $0x10] sm:$0xff]
                  %1960 = vst [vmem:[%s1954 + $0x20] sm:$0xff] %v1959
                  %v1961 = vld [vmem:[%s1953 + $0x18] sm:$0xff]
                  %1962 = vst [vmem:[%s1954 + $0x30] sm:$0xff] %v1961
                $region102: #{reconv_pallas.1} parent=96 // loop_footer
                  %s1952 = sadd.s32 1, %s1948
                $region103: #{reconv_pallas.1} parent=96 // loop_footer_branch
                  %1947 = sbr.rel target = $region99
                $region104: #{reconv_pallas.1} parent=96 // loop_exit
                  _
              $region97: #{reconv_pallas.1} parent=81 // pred_fallthru
                _
              // Predicated region
              $region105: #{reconv_pallas.1} parent=81 // pred_check
                _
              $region106: #{reconv_pallas.1} parent=81 // pred_check_branch
                %1964 = sbr.rel target = $region108
              $region107: #{reconv_pallas.1} parent=81 // pred_region
                _
              $region108: #{reconv_pallas.1} parent=81 // pred_fallthru
                _
            $region82: #{reconv_pallas.1} parent=77 // pred_fallthru
              _
            // Predicated region
            $region83: #{reconv_pallas.1} parent=77 // pred_check
              _
            $region84: #{reconv_pallas.1} parent=77 // pred_check_branch
              %1927 = sbr.rel target = $region86
            $region85: #{reconv_pallas.1} parent=77 // pred_region
              loop: start=0, step=1, limit=1
              $region87: #{reconv_pallas.1} parent=85 // loop_pre_header
                _
              $region88: #{reconv_pallas.1} parent=85 // loop_header
                %s1930 = sphi 0, %s1934
                %p1931 = scmp.ge.s32.totalorder %s1930, 1
                %s1935 = sphi %s1914, %s1914
                %s1936 = sphi %s1921, %s1921
              $region89: #{reconv_pallas.1} parent=85 // loop_header_branch
                %1933 = sbr.rel (%p1931) target = $region93
              $region90: #{reconv_pallas.1} parent=85 // loop_body
                %v1937 = vld [vmem:[%s1935] sm:$0xff]
                %1938 = vst [vmem:[%s1936] sm:$0xff] %v1937
                %v1939 = vld [vmem:[%s1935 + $0x8] sm:$0xff]
                %1940 = vst [vmem:[%s1936 + $0x10] sm:$0xff] %v1939
                %v1941 = vld [vmem:[%s1935 + $0x10] sm:$0xff]
                %1942 = vst [vmem:[%s1936 + $0x20] sm:$0xff] %v1941
                %v1943 = vld [vmem:[%s1935 + $0x18] sm:$0xff]
                %1944 = vst [vmem:[%s1936 + $0x30] sm:$0xff] %v1943
              $region91: #{reconv_pallas.1} parent=85 // loop_footer
                %s1934 = sadd.s32 1, %s1930
              $region92: #{reconv_pallas.1} parent=85 // loop_footer_branch
                %1929 = sbr.rel target = $region88
              $region93: #{reconv_pallas.1} parent=85 // loop_exit
                _
            $region86: #{reconv_pallas.1} parent=77 // pred_fallthru
              _
          $region78: #{reconv_pallas.1} parent=73 // pred_fallthru
            _
          %1965 = vnop
        $region74: #{reconv_pallas.1} parent=65 // pred_fallthru
          _
      $region66: #{reconv_pallas.1} parent=5 // pred_fallthru
        _
      %p1966 = scmp.le.s32.totalorder 2, %s9
      // Predicated region
      $region109: #{reconv_pallas.1} parent=5 // pred_check
        %p1967 = pneg %p1966
      $region110: #{reconv_pallas.1} parent=5 // pred_check_branch
        %1969 = sbr.rel (%p1967) target = $region112
      $region111: #{reconv_pallas.1} parent=5 // pred_region
        %s1970 = ssub.s32 %s9, 2
        // Predicated region
        $region113: #{reconv_pallas.1} parent=111 // pred_check
          %p1971 = pneg %p129
        $region114: #{reconv_pallas.1} parent=111 // pred_check_branch
          %1973 = sbr.rel (%p1971) target = $region116
        $region115: #{reconv_pallas.1} parent=111 // pred_region
          %s1974 = sand.u32 %s114, 1
          %s1975 = sand.u32 %s114, 1
          %s1976 = smul.addr %s1975, 32
          %s1977 = scalar_lea.vmem [#allocation3], %s1976
        $region116: #{reconv_pallas.1} parent=111 // pred_fallthru
          _
      $region112: #{reconv_pallas.1} parent=5 // pred_fallthru
        _
    $region6: #{reconv_pallas.1} parent=1 // loop_footer
      %s13 = sadd.s32 1, %s9
    $region7: #{reconv_pallas.1} parent=1 // loop_footer_branch
      %8 = sbr.rel target = $region3
    $region8: #{reconv_pallas.1} parent=1 // loop_exit
      _

</llo_original>
